<compile_context>
chip_gen: v6e
topology: v6e:2x2x1
jax: 0.10.0
libtpu: 0.0.40
codegen_flags: <defaults>
</compile_context>

<pallas_src>
import math

import jax
import jax.numpy as jnp
from jax import lax
from jax.experimental import pallas as pl
from jax.experimental.pallas import tpu as pltpu  # noqa: F401  (TPU backend)

# Small, module-consistent shapes.
L, N, E, H, FF = 8, 2, 32, 4, 64          # seq, batch, embed_dim, num_heads, ff_hidden_layer
HD = E // H                               # head dim
M = L * N                                 # flattened (seq * batch) rows
EPS = 1e-5                                # LayerNorm eps (PyTorch default)
NEG_INF = -1e9

# Bias/gain table row layout (one (8,128) f32 vreg):
#   row 0: b_qkv (3E=96 lanes, Q part pre-scaled)    row 4: b1  (FF=64)
#   row 1: b_out (E=32)                              row 5: b2  (E)
#   row 2: ln1 gamma (E)                             row 6: ln2 gamma (E)
#   row 3: ln1 beta  (E)                             row 7: ln2 beta  (E)


def _layernorm(z, g, b):
    mu = jnp.mean(z, axis=-1, keepdims=True)
    var = jnp.mean((z - mu) ** 2, axis=-1, keepdims=True)
    return (z - mu) * lax.rsqrt(var + EPS) * g + b


def decoder_block_kernel(x_ref, mask_ref, wqkv_ref, wo_ref, w1_ref, w2_ref,
                         tbl_ref, o_ref):
    x = x_ref[...].astype(jnp.float32)        # (M, E): batch+seq flattened
    mask = mask_ref[...]                      # (M, M) combined causal + batch-block mask
    tbl = tbl_ref[...]                        # (8, 128) packed biases/gains

    # Fused QKV projection: one matmul, one bias add.  Q columns of the weight
    # and bias already carry the 1/sqrt(HD) softmax scale (folded on host).
    qkv = jnp.dot(x, wqkv_ref[...],
                  preferred_element_type=jnp.float32) + tbl[0:1, 0:3 * E]   # (M, 3E)

    wo = wo_ref[...]                          # (E, E) pre-transposed out projection

    # Multi-head attention accumulated through w_out row-blocks: no concatenate,
    # w_out slices are 8-aligned sublane slices; q/k/v head slices are static
    # lane slices of the fused qkv (same cost as before).
    acc = jnp.zeros((M, E), jnp.float32)
    for h in range(H):                        # static loop, H = 4
        lo = h * HD
        qh = qkv[:, lo:lo + HD]               # (M, HD)  (already scaled)
        kh = qkv[:, E + lo:E + lo + HD]
        vh = qkv[:, 2 * E + lo:2 * E + lo + HD]
        # NT matmul (contract dim 1 of both) — no explicit transpose in kernel.
        s = lax.dot_general(qh, kh, (((1,), (1,)), ((), ())),
                            preferred_element_type=jnp.float32) + mask
        s = s - jnp.max(s, axis=-1, keepdims=True)
        e = jnp.exp(s)
        # EUP approximate reciprocal for the softmax denominator (free slot).
        p = e * pl.reciprocal(jnp.sum(e, axis=-1, keepdims=True), approx=True)
        ctx = jnp.dot(p, vh, preferred_element_type=jnp.float32)           # (M, HD)
        acc = acc + jnp.dot(ctx, wo[lo:lo + HD, :],
                            preferred_element_type=jnp.float32)            # (M, E)
    attn = acc + tbl[1:2, 0:E]                # + b_out

    # dropout1 is identity in eval mode.
    x1 = _layernorm(x + attn, tbl[2:3, 0:E], tbl[3:4, 0:E])

    # ---- feed forward ----
    h1 = jnp.maximum(
        jnp.dot(x1, w1_ref[...], preferred_element_type=jnp.float32) + tbl[4:5, 0:FF], 0.0)
    ff = jnp.dot(h1, w2_ref[...], preferred_element_type=jnp.float32) + tbl[5:6, 0:E]

    # dropout2 is identity in eval mode.
    x2 = _layernorm(x1 + ff, tbl[6:7, 0:E], tbl[7:8, 0:E])
    o_ref[...] = x2.astype(o_ref.dtype)


def _prepare_params(params):
    """One-time host-side layout plumbing: fuse+transpose weights, pack biases."""
    (w_in, b_in, w_out, b_out, g1, be1, w1, b1, w2, b2, g2, be2) = params
    scale = 1.0 / math.sqrt(HD)

    # Fused QKV weight (E, 3E), Q columns pre-scaled by 1/sqrt(HD).
    wq_t = w_in[:E].T * scale
    wk_t = w_in[E:2 * E].T
    wv_t = w_in[2 * E:].T
    w_qkv_t = jnp.concatenate([wq_t, wk_t, wv_t], axis=1)                  # (E, 3E)
    b_qkv = jnp.concatenate([b_in[:, :E] * scale, b_in[:, E:2 * E], b_in[:, 2 * E:]],
                            axis=1)                                        # (1, 3E)

    wo_t = w_out.T                                                         # (E, E)
    w1_t = w1.T                                                            # (E, FF)
    w2_t = w2.T                                                            # (FF, E)

    # Pack every small bias/gain vector into one lane-dense (8,128) table.
    tbl = jnp.zeros((8, 128), jnp.float32)
    tbl = tbl.at[0, :3 * E].set(b_qkv[0])
    tbl = tbl.at[1, :E].set(b_out[0])
    tbl = tbl.at[2, :E].set(g1[0])
    tbl = tbl.at[3, :E].set(be1[0])
    tbl = tbl.at[4, :FF].set(b1[0])
    tbl = tbl.at[5, :E].set(b2[0])
    tbl = tbl.at[6, :E].set(g2[0])
    tbl = tbl.at[7, :E].set(be2[0])
    return (w_qkv_t, wo_t, w1_t, w2_t, tbl)


def _prepare_mask(target_mask):
    """Combined additive mask over the flattened (seq*batch) rows: causal within
    a batch element, -1e9 across batch elements (cross-batch exp underflows to 0
    after row-max subtraction)."""
    idx = jnp.arange(M)
    l_idx = idx // N
    n_idx = idx % N
    same = n_idx[:, None] == n_idx[None, :]
    return jnp.where(same, target_mask[l_idx[:, None], l_idx[None, :]],
                     NEG_INF).astype(jnp.float32)


def make_decoder_block(target_mask, params):
    """Builds a jitted per-call function.  All transposes / fusion / bias packing
    / mask construction happen once here; the per-call path contains only the
    Pallas custom call."""
    w_qkv_t, wo_t, w1_t, w2_t, tbl = jax.tree_util.tree_map(
        jax.device_put, _prepare_params(params))
    comb_mask = jax.device_put(_prepare_mask(target_mask))

    call = pl.pallas_call(
        decoder_block_kernel,
        out_shape=jax.ShapeDtypeStruct((M, E), jnp.float32),
    )

    @jax.jit
    def run(x_lne):
        x2d = x_lne.reshape(M, E)             # row i = (l = i // N, n = i % N)
        out = call(x2d, comb_mask, w_qkv_t, wo_t, w1_t, w2_t, tbl)
        return out.reshape(L, N, E)

    return run


def reference(x_lne, mask, params):
    """Pure-JAX reference of the same math (for a correctness check)."""
    (w_in, b_in, w_out, b_out, g1, be1, w1, b1, w2, b2, g2, be2) = params
    x = jnp.transpose(x_lne, (1, 0, 2))                                    # (N, L, E)
    qkv = jnp.einsum('nle,fe->nlf', x, w_in) + b_in
    q, k, v = qkv[..., :E], qkv[..., E:2 * E], qkv[..., 2 * E:]

    def split(t):
        return t.reshape(N, L, H, HD).transpose(0, 2, 1, 3)                # (N, H, L, HD)

    qh, kh, vh = split(q), split(k), split(v)
    s = jnp.einsum('nhld,nhmd->nhlm', qh, kh) / (HD ** 0.5) + mask
    p = jax.nn.softmax(s, axis=-1)
    o = jnp.einsum('nhlm,nhmd->nhld', p, vh).transpose(0, 2, 1, 3).reshape(N, L, E)
    attn = jnp.einsum('nle,fe->nlf', o, w_out) + b_out

    def ln(z, g, b):
        mu = z.mean(-1, keepdims=True)
        var = ((z - mu) ** 2).mean(-1, keepdims=True)
        return (z - mu) / jnp.sqrt(var + EPS) * g + b

    x1 = ln(x + attn, g1, be1)
    ff = jnp.maximum(jnp.einsum('nle,fe->nlf', x1, w1) + b1, 0.0) @ w2.T + b2
    x2 = ln(x1 + ff, g2, be2)
    return jnp.transpose(x2, (1, 0, 2))


if __name__ == "__main__":
    key = jax.random.PRNGKey(0)
    ks = jax.random.split(key, 10)

    def init(k, shape, scale=0.05):
        return jax.random.normal(k, shape, jnp.float32) * scale

    # Deterministic synthetic parameters (shapes follow the PyTorch module).
    w_in = init(ks[0], (3 * E, E));  b_in = init(ks[1], (1, 3 * E))
    w_out = init(ks[2], (E, E));     b_out = init(ks[3], (1, E))
    g1 = jnp.ones((1, E), jnp.float32); be1 = jnp.zeros((1, E), jnp.float32)
    w1 = init(ks[4], (FF, E));       b1 = init(ks[5], (1, FF))
    w2 = init(ks[6], (E, FF));       b2 = init(ks[7], (1, E))
    g2 = jnp.ones((1, E), jnp.float32); be2 = jnp.zeros((1, E), jnp.float32)
    params = (w_in, b_in, w_out, b_out, g1, be1, w1, b1, w2, b2, g2, be2)

    # Inputs: x is (L, N, E) seq-first; target_mask is an additive causal mask.
    x = jax.random.normal(ks[8], (L, N, E), jnp.float32)
    mask = jnp.where(jnp.tril(jnp.ones((L, L), dtype=bool)), 0.0, NEG_INF).astype(jnp.float32)

    run = make_decoder_block(mask, params)    # one-time prep (weights, biases, mask)
    out = jax.block_until_ready(run(x))
    ref = reference(x, mask, params)
    assert out.shape == (L, N, E)
    # Tolerance relaxed to cover the EUP approximate reciprocal in the softmax
    # denominator (~2^-12 relative, compounding through out-proj + LayerNorm).
    assert jnp.allclose(out, ref, atol=2e-3, rtol=2e-3)
    print("KERNEL_OK")
</pallas_src>

<mosaic_0001>
module attributes {stable_mosaic.version = 11 : i64} {
  func.func @decoder_block_kernel(%arg0: memref<16x32xf32, #tpu.memory_space<vmem>>, %arg1: memref<16x16xf32, #tpu.memory_space<vmem>>, %arg2: memref<32x96xf32, #tpu.memory_space<vmem>>, %arg3: memref<32x32xf32, #tpu.memory_space<vmem>>, %arg4: memref<32x64xf32, #tpu.memory_space<vmem>>, %arg5: memref<64x32xf32, #tpu.memory_space<vmem>>, %arg6: memref<8x128xf32, #tpu.memory_space<vmem>>, %arg7: memref<16x32xf32, #tpu.memory_space<vmem>>) attributes {dimension_semantics = [], scalar_prefetch = 0 : i64, scratch_operands = 0 : i64, tpu.core_type = #tpu.core_type<tc>} {
    %c0 = arith.constant 0 : index
    %c0_0 = arith.constant 0 : index
    %0 = vector.load %arg0[%c0, %c0_0] : memref<16x32xf32, #tpu.memory_space<vmem>>, vector<16x32xf32>
    %c0_1 = arith.constant 0 : index
    %c0_2 = arith.constant 0 : index
    %1 = vector.load %arg1[%c0_1, %c0_2] : memref<16x16xf32, #tpu.memory_space<vmem>>, vector<16x16xf32>
    %c0_3 = arith.constant 0 : index
    %c0_4 = arith.constant 0 : index
    %2 = vector.load %arg6[%c0_3, %c0_4] : memref<8x128xf32, #tpu.memory_space<vmem>>, vector<8x128xf32>
    %c0_5 = arith.constant 0 : index
    %c0_6 = arith.constant 0 : index
    %3 = vector.load %arg2[%c0_5, %c0_6] : memref<32x96xf32, #tpu.memory_space<vmem>>, vector<32x96xf32>
    %cst = arith.constant dense<0.000000e+00> : vector<16x96xf32>
    %4 = tpu.matmul %0, %3, %cst {dimension_numbers = #tpu.dot_dimension_numbers<[1], [0], [0], [1], [0, 0, 1, 1], [], []>} : vector<16x32xf32>, vector<32x96xf32>, vector<16x96xf32> -> vector<16x96xf32>
    %5 = vector.extract_strided_slice %2 {offsets = [0, 0], sizes = [1, 96], strides = [1, 1]} : vector<8x128xf32> to vector<1x96xf32>
    %6 = vector.broadcast %5 : vector<1x96xf32> to vector<16x96xf32>
    %7 = arith.addf %4, %6 : vector<16x96xf32>
    %c0_7 = arith.constant 0 : index
    %c0_8 = arith.constant 0 : index
    %8 = vector.load %arg3[%c0_7, %c0_8] : memref<32x32xf32, #tpu.memory_space<vmem>>, vector<32x32xf32>
    %cst_9 = arith.constant 0.000000e+00 : f32
    %9 = vector.broadcast %cst_9 : f32 to vector<16x32xf32>
    %10 = vector.extract_strided_slice %7 {offsets = [0, 0], sizes = [16, 8], strides = [1, 1]} : vector<16x96xf32> to vector<16x8xf32>
    %11 = vector.extract_strided_slice %7 {offsets = [0, 32], sizes = [16, 8], strides = [1, 1]} : vector<16x96xf32> to vector<16x8xf32>
    %12 = vector.extract_strided_slice %7 {offsets = [0, 64], sizes = [16, 8], strides = [1, 1]} : vector<16x96xf32> to vector<16x8xf32>
    %cst_10 = arith.constant dense<0.000000e+00> : vector<16x16xf32>
    %13 = tpu.matmul %10, %11, %cst_10 {dimension_numbers = #tpu.dot_dimension_numbers<[1], [1], [0], [0], [0, 0, 1, 0], [], []>} : vector<16x8xf32>, vector<16x8xf32>, vector<16x16xf32> -> vector<16x16xf32>
    %14 = arith.addf %13, %1 : vector<16x16xf32>
    %cst_11 = arith.constant dense<0xFF800000> : vector<16xf32>
    %15 = vector.multi_reduction <maximumf>, %14, %cst_11 [1] : vector<16x16xf32> to vector<16xf32>
    %16 = vector.shape_cast %15 : vector<16xf32> to vector<16x1xf32>
    %17 = vector.broadcast %16 : vector<16x1xf32> to vector<16x16xf32>
    %18 = arith.subf %14, %17 : vector<16x16xf32>
    %19 = math.exp %18 : vector<16x16xf32>
    %cst_12 = arith.constant dense<0.000000e+00> : vector<16xf32>
    %20 = vector.multi_reduction <add>, %19, %cst_12 [1] : vector<16x16xf32> to vector<16xf32>
    %21 = vector.shape_cast %20 : vector<16xf32> to vector<16x1xf32>
    %22 = tpu.reciprocal %21 {approx = true} : vector<16x1xf32> -> vector<16x1xf32>
    %23 = vector.broadcast %22 : vector<16x1xf32> to vector<16x16xf32>
    %24 = arith.mulf %19, %23 : vector<16x16xf32>
    %cst_13 = arith.constant dense<0.000000e+00> : vector<16x8xf32>
    %25 = tpu.matmul %24, %12, %cst_13 {dimension_numbers = #tpu.dot_dimension_numbers<[1], [0], [0], [1], [0, 0, 1, 1], [], []>} : vector<16x16xf32>, vector<16x8xf32>, vector<16x8xf32> -> vector<16x8xf32>
    %26 = vector.extract_strided_slice %8 {offsets = [0, 0], sizes = [8, 32], strides = [1, 1]} : vector<32x32xf32> to vector<8x32xf32>
    %cst_14 = arith.constant dense<0.000000e+00> : vector<16x32xf32>
    %27 = tpu.matmul %25, %26, %cst_14 {dimension_numbers = #tpu.dot_dimension_numbers<[1], [0], [0], [1], [0, 0, 1, 1], [], []>} : vector<16x8xf32>, vector<8x32xf32>, vector<16x32xf32> -> vector<16x32xf32>
    %28 = arith.addf %9, %27 : vector<16x32xf32>
    %29 = vector.extract_strided_slice %7 {offsets = [0, 8], sizes = [16, 8], strides = [1, 1]} : vector<16x96xf32> to vector<16x8xf32>
    %30 = vector.extract_strided_slice %7 {offsets = [0, 40], sizes = [16, 8], strides = [1, 1]} : vector<16x96xf32> to vector<16x8xf32>
    %31 = vector.extract_strided_slice %7 {offsets = [0, 72], sizes = [16, 8], strides = [1, 1]} : vector<16x96xf32> to vector<16x8xf32>
    %cst_15 = arith.constant dense<0.000000e+00> : vector<16x16xf32>
    %32 = tpu.matmul %29, %30, %cst_15 {dimension_numbers = #tpu.dot_dimension_numbers<[1], [1], [0], [0], [0, 0, 1, 0], [], []>} : vector<16x8xf32>, vector<16x8xf32>, vector<16x16xf32> -> vector<16x16xf32>
    %33 = arith.addf %32, %1 : vector<16x16xf32>
    %cst_16 = arith.constant dense<0xFF800000> : vector<16xf32>
    %34 = vector.multi_reduction <maximumf>, %33, %cst_16 [1] : vector<16x16xf32> to vector<16xf32>
    %35 = vector.shape_cast %34 : vector<16xf32> to vector<16x1xf32>
    %36 = vector.broadcast %35 : vector<16x1xf32> to vector<16x16xf32>
    %37 = arith.subf %33, %36 : vector<16x16xf32>
    %38 = math.exp %37 : vector<16x16xf32>
    %cst_17 = arith.constant dense<0.000000e+00> : vector<16xf32>
    %39 = vector.multi_reduction <add>, %38, %cst_17 [1] : vector<16x16xf32> to vector<16xf32>
    %40 = vector.shape_cast %39 : vector<16xf32> to vector<16x1xf32>
    %41 = tpu.reciprocal %40 {approx = true} : vector<16x1xf32> -> vector<16x1xf32>
    %42 = vector.broadcast %41 : vector<16x1xf32> to vector<16x16xf32>
    %43 = arith.mulf %38, %42 : vector<16x16xf32>
    %cst_18 = arith.constant dense<0.000000e+00> : vector<16x8xf32>
    %44 = tpu.matmul %43, %31, %cst_18 {dimension_numbers = #tpu.dot_dimension_numbers<[1], [0], [0], [1], [0, 0, 1, 1], [], []>} : vector<16x16xf32>, vector<16x8xf32>, vector<16x8xf32> -> vector<16x8xf32>
    %45 = vector.extract_strided_slice %8 {offsets = [8, 0], sizes = [8, 32], strides = [1, 1]} : vector<32x32xf32> to vector<8x32xf32>
    %cst_19 = arith.constant dense<0.000000e+00> : vector<16x32xf32>
    %46 = tpu.matmul %44, %45, %cst_19 {dimension_numbers = #tpu.dot_dimension_numbers<[1], [0], [0], [1], [0, 0, 1, 1], [], []>} : vector<16x8xf32>, vector<8x32xf32>, vector<16x32xf32> -> vector<16x32xf32>
    %47 = arith.addf %28, %46 : vector<16x32xf32>
    %48 = vector.extract_strided_slice %7 {offsets = [0, 16], sizes = [16, 8], strides = [1, 1]} : vector<16x96xf32> to vector<16x8xf32>
    %49 = vector.extract_strided_slice %7 {offsets = [0, 48], sizes = [16, 8], strides = [1, 1]} : vector<16x96xf32> to vector<16x8xf32>
    %50 = vector.extract_strided_slice %7 {offsets = [0, 80], sizes = [16, 8], strides = [1, 1]} : vector<16x96xf32> to vector<16x8xf32>
    %cst_20 = arith.constant dense<0.000000e+00> : vector<16x16xf32>
    %51 = tpu.matmul %48, %49, %cst_20 {dimension_numbers = #tpu.dot_dimension_numbers<[1], [1], [0], [0], [0, 0, 1, 0], [], []>} : vector<16x8xf32>, vector<16x8xf32>, vector<16x16xf32> -> vector<16x16xf32>
    %52 = arith.addf %51, %1 : vector<16x16xf32>
    %cst_21 = arith.constant dense<0xFF800000> : vector<16xf32>
    %53 = vector.multi_reduction <maximumf>, %52, %cst_21 [1] : vector<16x16xf32> to vector<16xf32>
    %54 = vector.shape_cast %53 : vector<16xf32> to vector<16x1xf32>
    %55 = vector.broadcast %54 : vector<16x1xf32> to vector<16x16xf32>
    %56 = arith.subf %52, %55 : vector<16x16xf32>
    %57 = math.exp %56 : vector<16x16xf32>
    %cst_22 = arith.constant dense<0.000000e+00> : vector<16xf32>
    %58 = vector.multi_reduction <add>, %57, %cst_22 [1] : vector<16x16xf32> to vector<16xf32>
    %59 = vector.shape_cast %58 : vector<16xf32> to vector<16x1xf32>
    %60 = tpu.reciprocal %59 {approx = true} : vector<16x1xf32> -> vector<16x1xf32>
    %61 = vector.broadcast %60 : vector<16x1xf32> to vector<16x16xf32>
    %62 = arith.mulf %57, %61 : vector<16x16xf32>
    %cst_23 = arith.constant dense<0.000000e+00> : vector<16x8xf32>
    %63 = tpu.matmul %62, %50, %cst_23 {dimension_numbers = #tpu.dot_dimension_numbers<[1], [0], [0], [1], [0, 0, 1, 1], [], []>} : vector<16x16xf32>, vector<16x8xf32>, vector<16x8xf32> -> vector<16x8xf32>
    %64 = vector.extract_strided_slice %8 {offsets = [16, 0], sizes = [8, 32], strides = [1, 1]} : vector<32x32xf32> to vector<8x32xf32>
    %cst_24 = arith.constant dense<0.000000e+00> : vector<16x32xf32>
    %65 = tpu.matmul %63, %64, %cst_24 {dimension_numbers = #tpu.dot_dimension_numbers<[1], [0], [0], [1], [0, 0, 1, 1], [], []>} : vector<16x8xf32>, vector<8x32xf32>, vector<16x32xf32> -> vector<16x32xf32>
    %66 = arith.addf %47, %65 : vector<16x32xf32>
    %67 = vector.extract_strided_slice %7 {offsets = [0, 24], sizes = [16, 8], strides = [1, 1]} : vector<16x96xf32> to vector<16x8xf32>
    %68 = vector.extract_strided_slice %7 {offsets = [0, 56], sizes = [16, 8], strides = [1, 1]} : vector<16x96xf32> to vector<16x8xf32>
    %69 = vector.extract_strided_slice %7 {offsets = [0, 88], sizes = [16, 8], strides = [1, 1]} : vector<16x96xf32> to vector<16x8xf32>
    %cst_25 = arith.constant dense<0.000000e+00> : vector<16x16xf32>
    %70 = tpu.matmul %67, %68, %cst_25 {dimension_numbers = #tpu.dot_dimension_numbers<[1], [1], [0], [0], [0, 0, 1, 0], [], []>} : vector<16x8xf32>, vector<16x8xf32>, vector<16x16xf32> -> vector<16x16xf32>
    %71 = arith.addf %70, %1 : vector<16x16xf32>
    %cst_26 = arith.constant dense<0xFF800000> : vector<16xf32>
    %72 = vector.multi_reduction <maximumf>, %71, %cst_26 [1] : vector<16x16xf32> to vector<16xf32>
    %73 = vector.shape_cast %72 : vector<16xf32> to vector<16x1xf32>
    %74 = vector.broadcast %73 : vector<16x1xf32> to vector<16x16xf32>
    %75 = arith.subf %71, %74 : vector<16x16xf32>
    %76 = math.exp %75 : vector<16x16xf32>
    %cst_27 = arith.constant dense<0.000000e+00> : vector<16xf32>
    %77 = vector.multi_reduction <add>, %76, %cst_27 [1] : vector<16x16xf32> to vector<16xf32>
    %78 = vector.shape_cast %77 : vector<16xf32> to vector<16x1xf32>
    %79 = tpu.reciprocal %78 {approx = true} : vector<16x1xf32> -> vector<16x1xf32>
    %80 = vector.broadcast %79 : vector<16x1xf32> to vector<16x16xf32>
    %81 = arith.mulf %76, %80 : vector<16x16xf32>
    %cst_28 = arith.constant dense<0.000000e+00> : vector<16x8xf32>
    %82 = tpu.matmul %81, %69, %cst_28 {dimension_numbers = #tpu.dot_dimension_numbers<[1], [0], [0], [1], [0, 0, 1, 1], [], []>} : vector<16x16xf32>, vector<16x8xf32>, vector<16x8xf32> -> vector<16x8xf32>
    %83 = vector.extract_strided_slice %8 {offsets = [24, 0], sizes = [8, 32], strides = [1, 1]} : vector<32x32xf32> to vector<8x32xf32>
    %cst_29 = arith.constant dense<0.000000e+00> : vector<16x32xf32>
    %84 = tpu.matmul %82, %83, %cst_29 {dimension_numbers = #tpu.dot_dimension_numbers<[1], [0], [0], [1], [0, 0, 1, 1], [], []>} : vector<16x8xf32>, vector<8x32xf32>, vector<16x32xf32> -> vector<16x32xf32>
    %85 = arith.addf %66, %84 : vector<16x32xf32>
    %86 = vector.extract_strided_slice %2 {offsets = [1, 0], sizes = [1, 32], strides = [1, 1]} : vector<8x128xf32> to vector<1x32xf32>
    %87 = vector.broadcast %86 : vector<1x32xf32> to vector<16x32xf32>
    %88 = arith.addf %85, %87 : vector<16x32xf32>
    %89 = arith.addf %0, %88 : vector<16x32xf32>
    %90 = vector.extract_strided_slice %2 {offsets = [2, 0], sizes = [1, 32], strides = [1, 1]} : vector<8x128xf32> to vector<1x32xf32>
    %91 = vector.extract_strided_slice %2 {offsets = [3, 0], sizes = [1, 32], strides = [1, 1]} : vector<8x128xf32> to vector<1x32xf32>
    %cst_30 = arith.constant dense<0.000000e+00> : vector<16xf32>
    %92 = vector.multi_reduction <add>, %89, %cst_30 [1] : vector<16x32xf32> to vector<16xf32>
    %93 = vector.shape_cast %92 : vector<16xf32> to vector<16x1xf32>
    %cst_31 = arith.constant 3.200000e+01 : f32
    %94 = vector.broadcast %cst_31 : f32 to vector<16x1xf32>
    %95 = arith.divf %93, %94 : vector<16x1xf32>
    %96 = vector.broadcast %95 : vector<16x1xf32> to vector<16x32xf32>
    %97 = arith.subf %89, %96 : vector<16x32xf32>
    %98 = arith.mulf %97, %97 : vector<16x32xf32>
    %cst_32 = arith.constant dense<0.000000e+00> : vector<16xf32>
    %99 = vector.multi_reduction <add>, %98, %cst_32 [1] : vector<16x32xf32> to vector<16xf32>
    %100 = vector.shape_cast %99 : vector<16xf32> to vector<16x1xf32>
    %cst_33 = arith.constant 3.200000e+01 : f32
    %101 = vector.broadcast %cst_33 : f32 to vector<16x1xf32>
    %102 = arith.divf %100, %101 : vector<16x1xf32>
    %103 = vector.broadcast %95 : vector<16x1xf32> to vector<16x32xf32>
    %104 = arith.subf %89, %103 : vector<16x32xf32>
    %cst_34 = arith.constant 9.99999974E-6 : f32
    %105 = vector.broadcast %cst_34 : f32 to vector<16x1xf32>
    %106 = arith.addf %102, %105 : vector<16x1xf32>
    %107 = math.rsqrt %106 : vector<16x1xf32>
    %108 = vector.broadcast %107 : vector<16x1xf32> to vector<16x32xf32>
    %109 = arith.mulf %104, %108 : vector<16x32xf32>
    %110 = vector.broadcast %90 : vector<1x32xf32> to vector<16x32xf32>
    %111 = arith.mulf %109, %110 : vector<16x32xf32>
    %112 = vector.broadcast %91 : vector<1x32xf32> to vector<16x32xf32>
    %113 = arith.addf %111, %112 : vector<16x32xf32>
    %c0_35 = arith.constant 0 : index
    %c0_36 = arith.constant 0 : index
    %114 = vector.load %arg4[%c0_35, %c0_36] : memref<32x64xf32, #tpu.memory_space<vmem>>, vector<32x64xf32>
    %cst_37 = arith.constant dense<0.000000e+00> : vector<16x64xf32>
    %115 = tpu.matmul %113, %114, %cst_37 {dimension_numbers = #tpu.dot_dimension_numbers<[1], [0], [0], [1], [0, 0, 1, 1], [], []>} : vector<16x32xf32>, vector<32x64xf32>, vector<16x64xf32> -> vector<16x64xf32>
    %116 = vector.extract_strided_slice %2 {offsets = [4, 0], sizes = [1, 64], strides = [1, 1]} : vector<8x128xf32> to vector<1x64xf32>
    %117 = vector.broadcast %116 : vector<1x64xf32> to vector<16x64xf32>
    %118 = arith.addf %115, %117 : vector<16x64xf32>
    %cst_38 = arith.constant 0.000000e+00 : f32
    %119 = vector.broadcast %cst_38 : f32 to vector<16x64xf32>
    %120 = arith.maximumf %118, %119 : vector<16x64xf32>
    %c0_39 = arith.constant 0 : index
    %c0_40 = arith.constant 0 : index
    %121 = vector.load %arg5[%c0_39, %c0_40] : memref<64x32xf32, #tpu.memory_space<vmem>>, vector<64x32xf32>
    %cst_41 = arith.constant dense<0.000000e+00> : vector<16x32xf32>
    %122 = tpu.matmul %120, %121, %cst_41 {dimension_numbers = #tpu.dot_dimension_numbers<[1], [0], [0], [1], [0, 0, 1, 1], [], []>} : vector<16x64xf32>, vector<64x32xf32>, vector<16x32xf32> -> vector<16x32xf32>
    %123 = vector.extract_strided_slice %2 {offsets = [5, 0], sizes = [1, 32], strides = [1, 1]} : vector<8x128xf32> to vector<1x32xf32>
    %124 = vector.broadcast %123 : vector<1x32xf32> to vector<16x32xf32>
    %125 = arith.addf %122, %124 : vector<16x32xf32>
    %126 = arith.addf %113, %125 : vector<16x32xf32>
    %127 = vector.extract_strided_slice %2 {offsets = [6, 0], sizes = [1, 32], strides = [1, 1]} : vector<8x128xf32> to vector<1x32xf32>
    %128 = vector.extract_strided_slice %2 {offsets = [7, 0], sizes = [1, 32], strides = [1, 1]} : vector<8x128xf32> to vector<1x32xf32>
    %cst_42 = arith.constant dense<0.000000e+00> : vector<16xf32>
    %129 = vector.multi_reduction <add>, %126, %cst_42 [1] : vector<16x32xf32> to vector<16xf32>
    %130 = vector.shape_cast %129 : vector<16xf32> to vector<16x1xf32>
    %cst_43 = arith.constant 3.200000e+01 : f32
    %131 = vector.broadcast %cst_43 : f32 to vector<16x1xf32>
    %132 = arith.divf %130, %131 : vector<16x1xf32>
    %133 = vector.broadcast %132 : vector<16x1xf32> to vector<16x32xf32>
    %134 = arith.subf %126, %133 : vector<16x32xf32>
    %135 = arith.mulf %134, %134 : vector<16x32xf32>
    %cst_44 = arith.constant dense<0.000000e+00> : vector<16xf32>
    %136 = vector.multi_reduction <add>, %135, %cst_44 [1] : vector<16x32xf32> to vector<16xf32>
    %137 = vector.shape_cast %136 : vector<16xf32> to vector<16x1xf32>
    %cst_45 = arith.constant 3.200000e+01 : f32
    %138 = vector.broadcast %cst_45 : f32 to vector<16x1xf32>
    %139 = arith.divf %137, %138 : vector<16x1xf32>
    %140 = vector.broadcast %132 : vector<16x1xf32> to vector<16x32xf32>
    %141 = arith.subf %126, %140 : vector<16x32xf32>
    %cst_46 = arith.constant 9.99999974E-6 : f32
    %142 = vector.broadcast %cst_46 : f32 to vector<16x1xf32>
    %143 = arith.addf %139, %142 : vector<16x1xf32>
    %144 = math.rsqrt %143 : vector<16x1xf32>
    %145 = vector.broadcast %144 : vector<16x1xf32> to vector<16x32xf32>
    %146 = arith.mulf %141, %145 : vector<16x32xf32>
    %147 = vector.broadcast %127 : vector<1x32xf32> to vector<16x32xf32>
    %148 = arith.mulf %146, %147 : vector<16x32xf32>
    %149 = vector.broadcast %128 : vector<1x32xf32> to vector<16x32xf32>
    %150 = arith.addf %148, %149 : vector<16x32xf32>
    %c0_47 = arith.constant 0 : index
    %c0_48 = arith.constant 0 : index
    %151 = vector.load %arg7[%c0_47, %c0_48] : memref<16x32xf32, #tpu.memory_space<vmem>>, vector<16x32xf32>
    tpu.vector_store %arg7[%c0_47, %c0_48], %150 {strides = array<i32>} : memref<16x32xf32, #tpu.memory_space<vmem>>, vector<16x32xf32>,
    return
  }
}

</mosaic_0001>

<llo_original>
// kernel: run.1
$region0: #{run.1}
  #allocation0 [shape = 'u32[]', space=smem, size = 0x4, offset = 0x4, fixed_abs, tag = 'smem constant byte address 0x4 - core index']
  #allocation1 [shape = 'u32[144,128]{1,0:T(1,128)}', space=vmem, size = 0x12000, scoped, tag = 'internal scratch']
  %s0 = inlined_call_operand.hbm [shape: f32[16,32], index: 0, kind: input, shape index: {}]
  %s1 = inlined_call_operand.hbm [shape: f32[16,16], index: 1, kind: input, shape index: {}]
  %s2 = inlined_call_operand.hbm [shape: f32[32,96], index: 2, kind: input, shape index: {}]
  %s3 = inlined_call_operand.hbm [shape: f32[32,32], index: 3, kind: input, shape index: {}]
  %s4 = inlined_call_operand.hbm [shape: f32[32,64], index: 4, kind: input, shape index: {}]
  %s5 = inlined_call_operand.hbm [shape: f32[64,32], index: 5, kind: input, shape index: {}]
  %s6 = inlined_call_operand.vmem [shape: f32[8,128], index: 6, kind: input, shape index: {}]
  %s7 = inlined_call_operand.hbm [shape: f32[16,32], index: 7, kind: output, shape index: {}]
  %s8 = sld [smem:[#allocation0]]
  $region62: #{run.1} parent=0
    _
  %s10 = ssub.s32 1, %s8
  %s11 = scalar_select 0, %s10, %s8
  $region1: #{run.1} parent=0
    #allocation2 [shape = 'u8[8192]{0}', space=vmem, size = 0x2000, scoped, tag = 'input window, operand 0, single buffered']
    #allocation3 [shape = 's32[1]{0}', space=sflag, size = 0x4, scoped, tag = 'scoped memory for run.1']
    #allocation4 [shape = 's32[1]{0}', space=sflag, size = 0x4, scoped, tag = 'scoped memory for run.1']
    #allocation5 [shape = 'u8[8192]{0}', space=vmem, size = 0x2000, scoped, tag = 'input window, operand 1, single buffered']
    #allocation6 [shape = 's32[1]{0}', space=sflag, size = 0x4, scoped, tag = 'scoped memory for run.1']
    #allocation7 [shape = 'u8[16384]{0}', space=vmem, size = 0x4000, scoped, tag = 'input window, operand 2, single buffered']
    #allocation8 [shape = 'u8[16384]{0}', space=vmem, size = 0x4000, scoped, tag = 'input window, operand 3, single buffered']
    #allocation9 [shape = 's32[1]{0}', space=sflag, size = 0x4, scoped, tag = 'scoped memory for run.1']
    #allocation10 [shape = 'u8[16384]{0}', space=vmem, size = 0x4000, scoped, tag = 'input window, operand 4, single buffered']
    #allocation11 [shape = 'u8[32768]{0}', space=vmem, size = 0x8000, scoped, tag = 'input window, operand 5, single buffered']
    #allocation12 [shape = 's32[1]{0}', space=sflag, size = 0x4, scoped, tag = 'scoped memory for run.1']
    #allocation13 [shape = 'u8[8192]{0}', space=vmem, size = 0x2000, scoped, tag = 'output window, operand 0, single buffered']
    %12 = vsyncpa [#allocation3], 0
    %13 = vsyncpa [#allocation6], 0
    %14 = vsyncpa [#allocation9], 0
    %15 = vsyncpa [#allocation12], 0
    %16 = vsyncpa [#allocation4], 0
    // Predicated region
    $region2: #{run.1} parent=1 // pred_check
      _
    $region3: #{run.1} parent=1 // pred_check_branch
      %18 = sbr.rel (0) target = $region5
    $region4: #{run.1} parent=1 // pred_region
      %s20 = ssub.s32 256, 256
      %21 = vsyncadd [#allocation3], %s20
      %s22 = sshll.u32 [#allocation2], 4
      %s23 = int_to_ptr.vmem [resolvable:$true] %s22
      %28 = dma.hbm_to_vmem [thread:$0]  %s0, 256, %s23, [#allocation3], 128, 128, 8
    $region5: #{run.1} parent=1 // pred_fallthru
      _
    // Predicated region
    $region6: #{run.1} parent=1 // pred_check
      _
    $region7: #{run.1} parent=1 // pred_check_branch
      %30 = sbr.rel (0) target = $region9
    $region8: #{run.1} parent=1 // pred_region
      %s32 = ssub.s32 256, 256
      %33 = vsyncadd [#allocation6], %s32
      %s34 = sshll.u32 [#allocation5], 4
      %s35 = int_to_ptr.vmem [resolvable:$true] %s34
      %40 = dma.hbm_to_vmem [thread:$0]  %s1, 256, %s35, [#allocation6], 128, 128, 8
    $region9: #{run.1} parent=1 // pred_fallthru
      _
    // Predicated region
    $region10: #{run.1} parent=1 // pred_check
      _
    $region11: #{run.1} parent=1 // pred_check_branch
      %42 = sbr.rel (0) target = $region13
    $region12: #{run.1} parent=1 // pred_region
      %s44 = ssub.s32 512, 512
      %45 = vsyncadd [#allocation6], %s44
      %s46 = sshll.u32 [#allocation7], 4
      %s47 = int_to_ptr.vmem [resolvable:$true] %s46
      %52 = dma.hbm_to_vmem [thread:$0]  %s2, 512, %s47, [#allocation6], 128, 128, 8
    $region13: #{run.1} parent=1 // pred_fallthru
      _
    // Predicated region
    $region14: #{run.1} parent=1 // pred_check
      _
    $region15: #{run.1} parent=1 // pred_check_branch
      %54 = sbr.rel (0) target = $region17
    $region16: #{run.1} parent=1 // pred_region
      %s56 = ssub.s32 512, 512
      %57 = vsyncadd [#allocation9], %s56
      %s58 = sshll.u32 [#allocation8], 4
      %s59 = int_to_ptr.vmem [resolvable:$true] %s58
      %64 = dma.hbm_to_vmem [thread:$0]  %s3, 512, %s59, [#allocation9], 128, 128, 8
    $region17: #{run.1} parent=1 // pred_fallthru
      _
    // Predicated region
    $region18: #{run.1} parent=1 // pred_check
      _
    $region19: #{run.1} parent=1 // pred_check_branch
      %66 = sbr.rel (0) target = $region21
    $region20: #{run.1} parent=1 // pred_region
      %s68 = ssub.s32 512, 512
      %69 = vsyncadd [#allocation9], %s68
      %s70 = sshll.u32 [#allocation10], 4
      %s71 = int_to_ptr.vmem [resolvable:$true] %s70
      %76 = dma.hbm_to_vmem [thread:$0]  %s4, 512, %s71, [#allocation9], 128, 128, 8
    $region21: #{run.1} parent=1 // pred_fallthru
      _
    // Predicated region
    $region22: #{run.1} parent=1 // pred_check
      _
    $region23: #{run.1} parent=1 // pred_check_branch
      %78 = sbr.rel (0) target = $region25
    $region24: #{run.1} parent=1 // pred_region
      %s80 = ssub.s32 1024, 1024
      %81 = vsyncadd [#allocation12], %s80
      %s82 = sshll.u32 [#allocation11], 4
      %s83 = int_to_ptr.vmem [resolvable:$true] %s82
      %88 = dma.hbm_to_vmem [thread:$0]  %s5, 1024, %s83, [#allocation12], 128, 128, 8
    $region25: #{run.1} parent=1 // pred_fallthru
      _
    // Predicated region
    $region26: #{run.1} parent=1 // pred_check
      _
    $region27: #{run.1} parent=1 // pred_check_branch
      %90 = sbr.rel (0) target = $region29
    $region28: #{run.1} parent=1 // pred_region
      _
    $region29: #{run.1} parent=1 // pred_fallthru
      _
    // Predicated region
    $region30: #{run.1} parent=1 // pred_check
      _
    $region31: #{run.1} parent=1 // pred_check_branch
      %92 = sbr.rel (0) target = $region33
    $region32: #{run.1} parent=1 // pred_region
      %93 = dma.done [#allocation3], 256
    $region33: #{run.1} parent=1 // pred_fallthru
      _
    // Predicated region
    $region34: #{run.1} parent=1 // pred_check
      _
    $region35: #{run.1} parent=1 // pred_check_branch
      %95 = sbr.rel (0) target = $region37
    $region36: #{run.1} parent=1 // pred_region
      %96 = dma.done [#allocation6], 256
    $region37: #{run.1} parent=1 // pred_fallthru
      _
    // Predicated region
    $region38: #{run.1} parent=1 // pred_check
      _
    $region39: #{run.1} parent=1 // pred_check_branch
      %98 = sbr.rel (0) target = $region41
    $region40: #{run.1} parent=1 // pred_region
      %99 = dma.done [#allocation6], 512
    $region41: #{run.1} parent=1 // pred_fallthru
      _
    // Predicated region
    $region42: #{run.1} parent=1 // pred_check
      _
    $region43: #{run.1} parent=1 // pred_check_branch
      %101 = sbr.rel (0) target = $region45
    $region44: #{run.1} parent=1 // pred_region
      %102 = dma.done [#allocation9], 512
    $region45: #{run.1} parent=1 // pred_fallthru
      _
    // Predicated region
    $region46: #{run.1} parent=1 // pred_check
      _
    $region47: #{run.1} parent=1 // pred_check_branch
      %104 = sbr.rel (0) target = $region49
    $region48: #{run.1} parent=1 // pred_region
      %105 = dma.done [#allocation9], 512
    $region49: #{run.1} parent=1 // pred_fallthru
      _
    // Predicated region
    $region50: #{run.1} parent=1 // pred_check
      _
    $region51: #{run.1} parent=1 // pred_check_branch
      %107 = sbr.rel (0) target = $region53
    $region52: #{run.1} parent=1 // pred_region
      %108 = dma.done [#allocation12], 1024
    $region53: #{run.1} parent=1 // pred_fallthru
      _
    %v109 = vld [vmem:[#allocation2] sm:$0xff]
    %v110 = vld [vmem:[#allocation2 + $0x8] sm:$0xff]
    %v111 = vld [vmem:[#allocation5] sm:$0xff]
    %v112 = vld [vmem:[#allocation5 + $0x8] sm:$0xff]
    %v113 = vld [vmem:[%s6] sm:$0xff]
    %v114 = vld [vmem:[#allocation7] sm:$0xff]
    %v115 = vld [vmem:[#allocation7 + $0x8] sm:$0xff]
    %v116 = vld [vmem:[#allocation7 + $0x10] sm:$0xff]
    %v117 = vld [vmem:[#allocation7 + $0x18] sm:$0xff]
    %v118 = vlaneseq
    %v119 = vshrl.u32 %v118, 7
    %v120 = vsub.s32 0, %v119
    %v121 = vrot.slane %v113, %v120
    %vm122 = vcmask 261120
    %v124 = vsel %vm122, %v109, 0
    %v127 = vsel %vm122, %v110, 0
    %129 = vmatprep.subr.mxu0 0.0
    %130 = vmatpush1.msra.mxu0 0.0
    %131 = vmatprep.subr.mxu0 0.0
    %132 = vmatpush1.msra.mxu0 0.0
    %133 = vmatprep.subr.mxu0 0.0
    %134 = vmatpush1.msra.mxu0 0.0
    %135 = vmatprep.subr.mxu0 0.0
    %136 = vmatpush1.msra.mxu0 0.0
    %137 = vmatprep.subr.mxu0 0.0
    %138 = vmatpush1.msra.mxu0 0.0
    %139 = vmatprep.subr.mxu0 0.0
    %140 = vmatpush1.msra.mxu0 0.0
    %141 = vmatprep.subr.mxu0 0.0
    %142 = vmatpush1.msra.mxu0 0.0
    %143 = vmatprep.subr.mxu0 0.0
    %144 = vmatpush1.msra.mxu0 0.0
    %145 = vmatprep.subr.mxu0 0.0
    %146 = vmatpush1.msra.mxu0 0.0
    %147 = vmatprep.subr.mxu0 0.0
    %148 = vmatpush1.msra.mxu0 0.0
    %149 = vmatprep.subr.mxu0 0.0
    %150 = vmatpush1.msra.mxu0 0.0
    %151 = vmatprep.subr.mxu0 0.0
    %152 = vmatpush1.msra.mxu0 0.0
    %153 = vmatprep.subr.mxu0 0.0
    %154 = vmatpush1.msra.mxu0 %v117
    %155 = vmatprep.subr.mxu0 0.0
    %156 = vmatpush1.msra.mxu0 %v116
    %157 = vmatprep.subr.mxu0 0.0
    %158 = vmatpush1.msra.mxu0 %v115
    %159 = vmatprep.subr.mxu0 0.0
    %160 = vmatpush1.msra.mxu0 %v114
    %161 = vmatprep.subr.mxu0 0.0
    %162 = vmatpush2.msra.mxu0 0.0
    %163 = vmatprep.subr.mxu0 0.0
    %164 = vmatpush2.msra.mxu0 0.0
    %165 = vmatprep.subr.mxu0 0.0
    %166 = vmatpush2.msra.mxu0 0.0
    %167 = vmatprep.subr.mxu0 0.0
    %168 = vmatpush2.msra.mxu0 0.0
    %169 = vmatprep.subr.mxu0 0.0
    %170 = vmatpush2.msra.mxu0 0.0
    %171 = vmatprep.subr.mxu0 0.0
    %172 = vmatpush2.msra.mxu0 0.0
    %173 = vmatprep.subr.mxu0 0.0
    %174 = vmatpush2.msra.mxu0 0.0
    %175 = vmatprep.subr.mxu0 0.0
    %176 = vmatpush2.msra.mxu0 0.0
    %177 = vmatprep.subr.mxu0 0.0
    %178 = vmatpush2.msra.mxu0 0.0
    %179 = vmatprep.subr.mxu0 0.0
    %180 = vmatpush2.msra.mxu0 0.0
    %181 = vmatprep.subr.mxu0 0.0
    %182 = vmatpush2.msra.mxu0 0.0
    %183 = vmatprep.subr.mxu0 0.0
    %184 = vmatpush2.msra.mxu0 0.0
    %185 = vmatprep.subr.mxu0 0.0
    %186 = vmatpush2.msra.mxu0 0.0
    %187 = vmatprep.subr.mxu0 0.0
    %188 = vmatpush2.msra.mxu0 0.0
    %189 = vmatprep.subr.mxu0 0.0
    %190 = vmatpush2.msra.mxu0 0.0
    %191 = vmatprep.subr.mxu0 0.0
    %192 = vmatpush2.msra.mxu0 0.0
    %193 = vmatprep.mubr.f32.mxu0 0.0
    %194 = vmatmul.mubr.f32.gmra.mxu0 %v124
    %v195 = vpop.f32.mrf.mxu0
    %v196 = vadd.f32 %v121, %v195
    %v197 = vpop.f32.mrf.mxu0
    %198 = vmatprep.mubr.f32.mxu0 0.0
    %199 = vmatmul.mubr.f32.gmra.mxu0 %v127
    %v200 = vpop.f32.mrf.mxu0
    %v201 = vadd.f32 %v121, %v200
    %v202 = vpop.f32.mrf.mxu0
    %203 = vdwg.mxu0
    %v204 = vld [vmem:[#allocation8] sm:$0xff]
    %v205 = vld [vmem:[#allocation8 + $0x8] sm:$0xff]
    %v206 = vld [vmem:[#allocation8 + $0x10] sm:$0xff]
    %v207 = vld [vmem:[#allocation8 + $0x18] sm:$0xff]
    %210 = vrot.lane.b32.xlu0 %v196, 96
    %v211 = vpop.permute.xlu0 %210
    %212 = vrot.lane.b32.xlu0 %v201, 96
    %v213 = vpop.permute.xlu0 %212
    %vm214 = vcmask 64512
    %v215 = vsel %vm214, %v196, 0
    %v217 = vsel %vm214, %v201, 0
    %v219 = vsel %vm214, %v211, 0
    %v221 = vsel %vm214, %v213, 0
    %223 = vmatprep.subr.mxu0 0.0
    %224 = vmatpush1.xpose.msra.mxu0 0.0
    %225 = vmatprep.subr.mxu0 0.0
    %226 = vmatpush1.xpose.msra.mxu0 0.0
    %227 = vmatprep.subr.mxu0 0.0
    %228 = vmatpush1.xpose.msra.mxu0 0.0
    %229 = vmatprep.subr.mxu0 0.0
    %230 = vmatpush1.xpose.msra.mxu0 0.0
    %231 = vmatprep.subr.mxu0 0.0
    %232 = vmatpush1.xpose.msra.mxu0 0.0
    %233 = vmatprep.subr.mxu0 0.0
    %234 = vmatpush1.xpose.msra.mxu0 0.0
    %235 = vmatprep.subr.mxu0 0.0
    %236 = vmatpush1.xpose.msra.mxu0 0.0
    %237 = vmatprep.subr.mxu0 0.0
    %238 = vmatpush1.xpose.msra.mxu0 0.0
    %239 = vmatprep.subr.mxu0 0.0
    %240 = vmatpush1.xpose.msra.mxu0 0.0
    %241 = vmatprep.subr.mxu0 0.0
    %242 = vmatpush1.xpose.msra.mxu0 0.0
    %243 = vmatprep.subr.mxu0 0.0
    %244 = vmatpush1.xpose.msra.mxu0 0.0
    %245 = vmatprep.subr.mxu0 0.0
    %246 = vmatpush1.xpose.msra.mxu0 0.0
    %247 = vmatprep.subr.mxu0 0.0
    %248 = vmatpush1.xpose.msra.mxu0 0.0
    %249 = vmatprep.subr.mxu0 0.0
    %250 = vmatpush1.xpose.msra.mxu0 0.0
    %251 = vmatprep.subr.mxu0 0.0
    %252 = vmatpush1.xpose.msra.mxu0 %v221
    %253 = vmatprep.subr.mxu0 0.0
    %254 = vmatpush1.xpose.msra.mxu0 %v219
    %255 = vmatprep.subr.mxu0 0.0
    %256 = vmatpush2.xpose.msra.mxu0 0.0
    %257 = vmatprep.subr.mxu0 0.0
    %258 = vmatpush2.xpose.msra.mxu0 0.0
    %259 = vmatprep.subr.mxu0 0.0
    %260 = vmatpush2.xpose.msra.mxu0 0.0
    %261 = vmatprep.subr.mxu0 0.0
    %262 = vmatpush2.xpose.msra.mxu0 0.0
    %263 = vmatprep.subr.mxu0 0.0
    %264 = vmatpush2.xpose.msra.mxu0 0.0
    %265 = vmatprep.subr.mxu0 0.0
    %266 = vmatpush2.xpose.msra.mxu0 0.0
    %267 = vmatprep.subr.mxu0 0.0
    %268 = vmatpush2.xpose.msra.mxu0 0.0
    %269 = vmatprep.subr.mxu0 0.0
    %270 = vmatpush2.xpose.msra.mxu0 0.0
    %271 = vmatprep.subr.mxu0 0.0
    %272 = vmatpush2.xpose.msra.mxu0 0.0
    %273 = vmatprep.subr.mxu0 0.0
    %274 = vmatpush2.xpose.msra.mxu0 0.0
    %275 = vmatprep.subr.mxu0 0.0
    %276 = vmatpush2.xpose.msra.mxu0 0.0
    %277 = vmatprep.subr.mxu0 0.0
    %278 = vmatpush2.xpose.msra.mxu0 0.0
    %279 = vmatprep.subr.mxu0 0.0
    %280 = vmatpush2.xpose.msra.mxu0 0.0
    %281 = vmatprep.subr.mxu0 0.0
    %282 = vmatpush2.xpose.msra.mxu0 0.0
    %283 = vmatprep.subr.mxu0 0.0
    %284 = vmatpush2.xpose.msra.mxu0 0.0
    %285 = vmatprep.subr.mxu0 0.0
    %286 = vmatpush2.xpose.msra.mxu0 0.0
    %287 = vmatprep.mubr.f32.mxu0 0.0
    %288 = vmatmul.mubr.f32.gmra.mxu0 %v215
    %v289 = vpop.f32.mrf.mxu0
    %v290 = vadd.f32 %v111, %v289
    %v291 = vpop.f32.mrf.mxu0
    %292 = vmatprep.mubr.f32.mxu0 0.0
    %293 = vmatmul.mubr.f32.gmra.mxu0 %v217
    %v294 = vpop.f32.mrf.mxu0
    %v295 = vadd.f32 %v112, %v294
    %v296 = vpop.f32.mrf.mxu0
    %297 = vdwg.mxu0
    %vm298 = vcmask 130048
    %v299 = vsel %vm298, %v290, -inf
    %300 = vmax.xlane.f32.xlu0 %v299
    %v301 = vpop.xlane.xlu0 %300
    %v302 = vsel %vm298, %v295, -inf
    %303 = vmax.xlane.f32.xlu0 %v302
    %v304 = vpop.xlane.xlu0 %303
    %v305 = vsub.f32 %v290, %v301
    %v306 = vsub.f32 %v295, %v304
    %v307 = vmul.f32 %v305, 1.442695
    %v308 = vpow.pop %v307
    %v309 = vmul.f32 %v306, 1.442695
    %v310 = vpow.pop %v309
    %v311 = vsel %vm298, %v308, 0.0
    %312 = vadd.xlane.f32.xlu0 %v311
    %v313 = vpop.xlane.xlu0 %312
    %v314 = vsel %vm298, %v310, 0.0
    %315 = vadd.xlane.f32.xlu0 %v314
    %v316 = vpop.xlane.xlu0 %315
    %v317 = vrcp.pop %v313
    %v318 = vrcp.pop %v316
    %v319 = vmul.f32 %v308, %v317
    %v320 = vmul.f32 %v310, %v318
    %321 = vrot.lane.b32.xlu0 %v196, 64
    %v322 = vpop.permute.xlu0 %321
    %323 = vrot.lane.b32.xlu0 %v201, 64
    %v324 = vpop.permute.xlu0 %323
    %v328 = vsel %vm298, %v319, 0
    %v331 = vsel %vm298, %v320, 0
    %333 = vmatprep.subr.mxu0 0.0
    %334 = vmatpush1.msra.mxu0 0.0
    %335 = vmatprep.subr.mxu0 0.0
    %336 = vmatpush1.msra.mxu0 0.0
    %337 = vmatprep.subr.mxu0 0.0
    %338 = vmatpush1.msra.mxu0 0.0
    %339 = vmatprep.subr.mxu0 0.0
    %340 = vmatpush1.msra.mxu0 0.0
    %341 = vmatprep.subr.mxu0 0.0
    %342 = vmatpush1.msra.mxu0 0.0
    %343 = vmatprep.subr.mxu0 0.0
    %344 = vmatpush1.msra.mxu0 0.0
    %345 = vmatprep.subr.mxu0 0.0
    %346 = vmatpush1.msra.mxu0 0.0
    %347 = vmatprep.subr.mxu0 0.0
    %348 = vmatpush1.msra.mxu0 0.0
    %349 = vmatprep.subr.mxu0 0.0
    %350 = vmatpush1.msra.mxu0 0.0
    %351 = vmatprep.subr.mxu0 0.0
    %352 = vmatpush1.msra.mxu0 0.0
    %353 = vmatprep.subr.mxu0 0.0
    %354 = vmatpush1.msra.mxu0 0.0
    %355 = vmatprep.subr.mxu0 0.0
    %356 = vmatpush1.msra.mxu0 0.0
    %357 = vmatprep.subr.mxu0 0.0
    %358 = vmatpush1.msra.mxu0 0.0
    %359 = vmatprep.subr.mxu0 0.0
    %360 = vmatpush1.msra.mxu0 0.0
    %361 = vmatprep.subr.mxu0 0.0
    %362 = vmatpush1.msra.mxu0 %v324
    %363 = vmatprep.subr.mxu0 0.0
    %364 = vmatpush1.msra.mxu0 %v322
    %365 = vmatprep.subr.mxu0 0.0
    %366 = vmatpush2.msra.mxu0 0.0
    %367 = vmatprep.subr.mxu0 0.0
    %368 = vmatpush2.msra.mxu0 0.0
    %369 = vmatprep.subr.mxu0 0.0
    %370 = vmatpush2.msra.mxu0 0.0
    %371 = vmatprep.subr.mxu0 0.0
    %372 = vmatpush2.msra.mxu0 0.0
    %373 = vmatprep.subr.mxu0 0.0
    %374 = vmatpush2.msra.mxu0 0.0
    %375 = vmatprep.subr.mxu0 0.0
    %376 = vmatpush2.msra.mxu0 0.0
    %377 = vmatprep.subr.mxu0 0.0
    %378 = vmatpush2.msra.mxu0 0.0
    %379 = vmatprep.subr.mxu0 0.0
    %380 = vmatpush2.msra.mxu0 0.0
    %381 = vmatprep.subr.mxu0 0.0
    %382 = vmatpush2.msra.mxu0 0.0
    %383 = vmatprep.subr.mxu0 0.0
    %384 = vmatpush2.msra.mxu0 0.0
    %385 = vmatprep.subr.mxu0 0.0
    %386 = vmatpush2.msra.mxu0 0.0
    %387 = vmatprep.subr.mxu0 0.0
    %388 = vmatpush2.msra.mxu0 0.0
    %389 = vmatprep.subr.mxu0 0.0
    %390 = vmatpush2.msra.mxu0 0.0
    %391 = vmatprep.subr.mxu0 0.0
    %392 = vmatpush2.msra.mxu0 0.0
    %393 = vmatprep.subr.mxu0 0.0
    %394 = vmatpush2.msra.mxu0 0.0
    %395 = vmatprep.subr.mxu0 0.0
    %396 = vmatpush2.msra.mxu0 0.0
    %397 = vmatprep.mubr.f32.mxu0 0.0
    %398 = vmatmul.mubr.f32.gmra.mxu0 %v328
    %v399 = vpop.f32.mrf.mxu0
    %v400 = vadd.f32 0.0, %v399
    %v401 = vpop.f32.mrf.mxu0
    %402 = vmatprep.mubr.f32.mxu0 0.0
    %403 = vmatmul.mubr.f32.gmra.mxu0 %v331
    %v404 = vpop.f32.mrf.mxu0
    %v405 = vadd.f32 0.0, %v404
    %v406 = vpop.f32.mrf.mxu0
    %407 = vdwg.mxu0
    %408 = vrot.lane.b32.xlu0 %v196, 120
    %v409 = vpop.permute.xlu0 %408
    %410 = vrot.lane.b32.xlu0 %v201, 120
    %v411 = vpop.permute.xlu0 %410
    %412 = vrot.lane.b32.xlu0 %v196, 88
    %v413 = vpop.permute.xlu0 %412
    %414 = vrot.lane.b32.xlu0 %v201, 88
    %v415 = vpop.permute.xlu0 %414
    %v416 = vsel %vm214, %v409, 0
    %v418 = vsel %vm214, %v411, 0
    %v420 = vsel %vm214, %v413, 0
    %v422 = vsel %vm214, %v415, 0
    %424 = vmatprep.subr.mxu0 0.0
    %425 = vmatpush1.xpose.msra.mxu0 0.0
    %426 = vmatprep.subr.mxu0 0.0
    %427 = vmatpush1.xpose.msra.mxu0 0.0
    %428 = vmatprep.subr.mxu0 0.0
    %429 = vmatpush1.xpose.msra.mxu0 0.0
    %430 = vmatprep.subr.mxu0 0.0
    %431 = vmatpush1.xpose.msra.mxu0 0.0
    %432 = vmatprep.subr.mxu0 0.0
    %433 = vmatpush1.xpose.msra.mxu0 0.0
    %434 = vmatprep.subr.mxu0 0.0
    %435 = vmatpush1.xpose.msra.mxu0 0.0
    %436 = vmatprep.subr.mxu0 0.0
    %437 = vmatpush1.xpose.msra.mxu0 0.0
    %438 = vmatprep.subr.mxu0 0.0
    %439 = vmatpush1.xpose.msra.mxu0 0.0
    %440 = vmatprep.subr.mxu0 0.0
    %441 = vmatpush1.xpose.msra.mxu0 0.0
    %442 = vmatprep.subr.mxu0 0.0
    %443 = vmatpush1.xpose.msra.mxu0 0.0
    %444 = vmatprep.subr.mxu0 0.0
    %445 = vmatpush1.xpose.msra.mxu0 0.0
    %446 = vmatprep.subr.mxu0 0.0
    %447 = vmatpush1.xpose.msra.mxu0 0.0
    %448 = vmatprep.subr.mxu0 0.0
    %449 = vmatpush1.xpose.msra.mxu0 0.0
    %450 = vmatprep.subr.mxu0 0.0
    %451 = vmatpush1.xpose.msra.mxu0 0.0
    %452 = vmatprep.subr.mxu0 0.0
    %453 = vmatpush1.xpose.msra.mxu0 %v422
    %454 = vmatprep.subr.mxu0 0.0
    %455 = vmatpush1.xpose.msra.mxu0 %v420
    %456 = vmatprep.subr.mxu0 0.0
    %457 = vmatpush2.xpose.msra.mxu0 0.0
    %458 = vmatprep.subr.mxu0 0.0
    %459 = vmatpush2.xpose.msra.mxu0 0.0
    %460 = vmatprep.subr.mxu0 0.0
    %461 = vmatpush2.xpose.msra.mxu0 0.0
    %462 = vmatprep.subr.mxu0 0.0
    %463 = vmatpush2.xpose.msra.mxu0 0.0
    %464 = vmatprep.subr.mxu0 0.0
    %465 = vmatpush2.xpose.msra.mxu0 0.0
    %466 = vmatprep.subr.mxu0 0.0
    %467 = vmatpush2.xpose.msra.mxu0 0.0
    %468 = vmatprep.subr.mxu0 0.0
    %469 = vmatpush2.xpose.msra.mxu0 0.0
    %470 = vmatprep.subr.mxu0 0.0
    %471 = vmatpush2.xpose.msra.mxu0 0.0
    %472 = vmatprep.subr.mxu0 0.0
    %473 = vmatpush2.xpose.msra.mxu0 0.0
    %474 = vmatprep.subr.mxu0 0.0
    %475 = vmatpush2.xpose.msra.mxu0 0.0
    %476 = vmatprep.subr.mxu0 0.0
    %477 = vmatpush2.xpose.msra.mxu0 0.0
    %478 = vmatprep.subr.mxu0 0.0
    %479 = vmatpush2.xpose.msra.mxu0 0.0
    %480 = vmatprep.subr.mxu0 0.0
    %481 = vmatpush2.xpose.msra.mxu0 0.0
    %482 = vmatprep.subr.mxu0 0.0
    %483 = vmatpush2.xpose.msra.mxu0 0.0
    %484 = vmatprep.subr.mxu0 0.0
    %485 = vmatpush2.xpose.msra.mxu0 0.0
    %486 = vmatprep.subr.mxu0 0.0
    %487 = vmatpush2.xpose.msra.mxu0 0.0
    %488 = vmatprep.mubr.f32.mxu0 0.0
    %489 = vmatmul.mubr.f32.gmra.mxu0 %v416
    %v490 = vpop.f32.mrf.mxu0
    %v491 = vadd.f32 %v111, %v490
    %v492 = vpop.f32.mrf.mxu0
    %493 = vmatprep.mubr.f32.mxu0 0.0
    %494 = vmatmul.mubr.f32.gmra.mxu0 %v418
    %v495 = vpop.f32.mrf.mxu0
    %v496 = vadd.f32 %v112, %v495
    %v497 = vpop.f32.mrf.mxu0
    %498 = vdwg.mxu0
    %v499 = vsel %vm298, %v491, -inf
    %500 = vmax.xlane.f32.xlu0 %v499
    %v501 = vpop.xlane.xlu0 %500
    %v502 = vsel %vm298, %v496, -inf
    %503 = vmax.xlane.f32.xlu0 %v502
    %v504 = vpop.xlane.xlu0 %503
    %v505 = vsub.f32 %v491, %v501
    %v506 = vsub.f32 %v496, %v504
    %v507 = vmul.f32 %v505, 1.442695
    %v508 = vpow.pop %v507
    %v509 = vmul.f32 %v506, 1.442695
    %v510 = vpow.pop %v509
    %v511 = vsel %vm298, %v508, 0.0
    %512 = vadd.xlane.f32.xlu0 %v511
    %v513 = vpop.xlane.xlu0 %512
    %v514 = vsel %vm298, %v510, 0.0
    %515 = vadd.xlane.f32.xlu0 %v514
    %v516 = vpop.xlane.xlu0 %515
    %v517 = vrcp.pop %v513
    %v518 = vrcp.pop %v516
    %v519 = vmul.f32 %v508, %v517
    %v520 = vmul.f32 %v510, %v518
    %521 = vrot.lane.b32.xlu0 %v196, 56
    %v522 = vpop.permute.xlu0 %521
    %523 = vrot.lane.b32.xlu0 %v201, 56
    %v524 = vpop.permute.xlu0 %523
    %v528 = vsel %vm298, %v519, 0
    %v531 = vsel %vm298, %v520, 0
    %533 = vmatprep.subr.mxu0 0.0
    %534 = vmatpush1.msra.mxu0 0.0
    %535 = vmatprep.subr.mxu0 0.0
    %536 = vmatpush1.msra.mxu0 0.0
    %537 = vmatprep.subr.mxu0 0.0
    %538 = vmatpush1.msra.mxu0 0.0
    %539 = vmatprep.subr.mxu0 0.0
    %540 = vmatpush1.msra.mxu0 0.0
    %541 = vmatprep.subr.mxu0 0.0
    %542 = vmatpush1.msra.mxu0 0.0
    %543 = vmatprep.subr.mxu0 0.0
    %544 = vmatpush1.msra.mxu0 0.0
    %545 = vmatprep.subr.mxu0 0.0
    %546 = vmatpush1.msra.mxu0 0.0
    %547 = vmatprep.subr.mxu0 0.0
    %548 = vmatpush1.msra.mxu0 0.0
    %549 = vmatprep.subr.mxu0 0.0
    %550 = vmatpush1.msra.mxu0 0.0
    %551 = vmatprep.subr.mxu0 0.0
    %552 = vmatpush1.msra.mxu0 0.0
    %553 = vmatprep.subr.mxu0 0.0
    %554 = vmatpush1.msra.mxu0 0.0
    %555 = vmatprep.subr.mxu0 0.0
    %556 = vmatpush1.msra.mxu0 0.0
    %557 = vmatprep.subr.mxu0 0.0
    %558 = vmatpush1.msra.mxu0 0.0
    %559 = vmatprep.subr.mxu0 0.0
    %560 = vmatpush1.msra.mxu0 0.0
    %561 = vmatprep.subr.mxu0 0.0
    %562 = vmatpush1.msra.mxu0 %v524
    %563 = vmatprep.subr.mxu0 0.0
    %564 = vmatpush1.msra.mxu0 %v522
    %565 = vmatprep.subr.mxu0 0.0
    %566 = vmatpush2.msra.mxu0 0.0
    %567 = vmatprep.subr.mxu0 0.0
    %568 = vmatpush2.msra.mxu0 0.0
    %569 = vmatprep.subr.mxu0 0.0
    %570 = vmatpush2.msra.mxu0 0.0
    %571 = vmatprep.subr.mxu0 0.0
    %572 = vmatpush2.msra.mxu0 0.0
    %573 = vmatprep.subr.mxu0 0.0
    %574 = vmatpush2.msra.mxu0 0.0
    %575 = vmatprep.subr.mxu0 0.0
    %576 = vmatpush2.msra.mxu0 0.0
    %577 = vmatprep.subr.mxu0 0.0
    %578 = vmatpush2.msra.mxu0 0.0
    %579 = vmatprep.subr.mxu0 0.0
    %580 = vmatpush2.msra.mxu0 0.0
    %581 = vmatprep.subr.mxu0 0.0
    %582 = vmatpush2.msra.mxu0 0.0
    %583 = vmatprep.subr.mxu0 0.0
    %584 = vmatpush2.msra.mxu0 0.0
    %585 = vmatprep.subr.mxu0 0.0
    %586 = vmatpush2.msra.mxu0 0.0
    %587 = vmatprep.subr.mxu0 0.0
    %588 = vmatpush2.msra.mxu0 0.0
    %589 = vmatprep.subr.mxu0 0.0
    %590 = vmatpush2.msra.mxu0 0.0
    %591 = vmatprep.subr.mxu0 0.0
    %592 = vmatpush2.msra.mxu0 0.0
    %593 = vmatprep.subr.mxu0 0.0
    %594 = vmatpush2.msra.mxu0 0.0
    %595 = vmatprep.subr.mxu0 0.0
    %596 = vmatpush2.msra.mxu0 0.0
    %597 = vmatprep.mubr.f32.mxu0 0.0
    %598 = vmatmul.mubr.f32.gmra.mxu0 %v528
    %v599 = vpop.f32.mrf.mxu0
    %v600 = vadd.f32 0.0, %v599
    %v601 = vpop.f32.mrf.mxu0
    %602 = vmatprep.mubr.f32.mxu0 0.0
    %603 = vmatmul.mubr.f32.gmra.mxu0 %v531
    %v604 = vpop.f32.mrf.mxu0
    %v605 = vadd.f32 0.0, %v604
    %v606 = vpop.f32.mrf.mxu0
    %607 = vdwg.mxu0
    %v609 = vsel %vm214, %v600, 0
    %v612 = vsel %vm214, %v605, 0
    %614 = vmatprep.subr.mxu0 0.0
    %615 = vmatpush1.msra.mxu0 0.0
    %616 = vmatprep.subr.mxu0 0.0
    %617 = vmatpush1.msra.mxu0 0.0
    %618 = vmatprep.subr.mxu0 0.0
    %619 = vmatpush1.msra.mxu0 0.0
    %620 = vmatprep.subr.mxu0 0.0
    %621 = vmatpush1.msra.mxu0 0.0
    %622 = vmatprep.subr.mxu0 0.0
    %623 = vmatpush1.msra.mxu0 0.0
    %624 = vmatprep.subr.mxu0 0.0
    %625 = vmatpush1.msra.mxu0 0.0
    %626 = vmatprep.subr.mxu0 0.0
    %627 = vmatpush1.msra.mxu0 0.0
    %628 = vmatprep.subr.mxu0 0.0
    %629 = vmatpush1.msra.mxu0 0.0
    %630 = vmatprep.subr.mxu0 0.0
    %631 = vmatpush1.msra.mxu0 0.0
    %632 = vmatprep.subr.mxu0 0.0
    %633 = vmatpush1.msra.mxu0 0.0
    %634 = vmatprep.subr.mxu0 0.0
    %635 = vmatpush1.msra.mxu0 0.0
    %636 = vmatprep.subr.mxu0 0.0
    %637 = vmatpush1.msra.mxu0 0.0
    %638 = vmatprep.subr.mxu0 0.0
    %639 = vmatpush1.msra.mxu0 0.0
    %640 = vmatprep.subr.mxu0 0.0
    %641 = vmatpush1.msra.mxu0 0.0
    %642 = vmatprep.subr.mxu0 0.0
    %643 = vmatpush1.msra.mxu0 0.0
    %644 = vmatprep.subr.mxu0 0.0
    %645 = vmatpush1.msra.mxu0 %v205
    %646 = vmatprep.subr.mxu0 0.0
    %647 = vmatpush2.msra.mxu0 0.0
    %648 = vmatprep.subr.mxu0 0.0
    %649 = vmatpush2.msra.mxu0 0.0
    %650 = vmatprep.subr.mxu0 0.0
    %651 = vmatpush2.msra.mxu0 0.0
    %652 = vmatprep.subr.mxu0 0.0
    %653 = vmatpush2.msra.mxu0 0.0
    %654 = vmatprep.subr.mxu0 0.0
    %655 = vmatpush2.msra.mxu0 0.0
    %656 = vmatprep.subr.mxu0 0.0
    %657 = vmatpush2.msra.mxu0 0.0
    %658 = vmatprep.subr.mxu0 0.0
    %659 = vmatpush2.msra.mxu0 0.0
    %660 = vmatprep.subr.mxu0 0.0
    %661 = vmatpush2.msra.mxu0 0.0
    %662 = vmatprep.subr.mxu0 0.0
    %663 = vmatpush2.msra.mxu0 0.0
    %664 = vmatprep.subr.mxu0 0.0
    %665 = vmatpush2.msra.mxu0 0.0
    %666 = vmatprep.subr.mxu0 0.0
    %667 = vmatpush2.msra.mxu0 0.0
    %668 = vmatprep.subr.mxu0 0.0
    %669 = vmatpush2.msra.mxu0 0.0
    %670 = vmatprep.subr.mxu0 0.0
    %671 = vmatpush2.msra.mxu0 0.0
    %672 = vmatprep.subr.mxu0 0.0
    %673 = vmatpush2.msra.mxu0 0.0
    %674 = vmatprep.subr.mxu0 0.0
    %675 = vmatpush2.msra.mxu0 0.0
    %676 = vmatprep.subr.mxu0 0.0
    %677 = vmatpush2.msra.mxu0 0.0
    %678 = vmatprep.mubr.f32.mxu0 0.0
    %679 = vmatmul.mubr.f32.gmra.mxu0 %v609
    %v680 = vpop.f32.mrf.mxu0
    %v681 = vadd.f32 0.0, %v680
    %v682 = vpop.f32.mrf.mxu0
    %683 = vmatprep.mubr.f32.mxu0 0.0
    %684 = vmatmul.mubr.f32.gmra.mxu0 %v612
    %v685 = vpop.f32.mrf.mxu0
    %v686 = vadd.f32 0.0, %v685
    %v687 = vpop.f32.mrf.mxu0
    %688 = vdwg.mxu0
    %v690 = vsel %vm214, %v400, 0
    %v693 = vsel %vm214, %v405, 0
    %695 = vmatprep.subr.mxu0 0.0
    %696 = vmatpush1.msra.mxu0 0.0
    %697 = vmatprep.subr.mxu0 0.0
    %698 = vmatpush1.msra.mxu0 0.0
    %699 = vmatprep.subr.mxu0 0.0
    %700 = vmatpush1.msra.mxu0 0.0
    %701 = vmatprep.subr.mxu0 0.0
    %702 = vmatpush1.msra.mxu0 0.0
    %703 = vmatprep.subr.mxu0 0.0
    %704 = vmatpush1.msra.mxu0 0.0
    %705 = vmatprep.subr.mxu0 0.0
    %706 = vmatpush1.msra.mxu0 0.0
    %707 = vmatprep.subr.mxu0 0.0
    %708 = vmatpush1.msra.mxu0 0.0
    %709 = vmatprep.subr.mxu0 0.0
    %710 = vmatpush1.msra.mxu0 0.0
    %711 = vmatprep.subr.mxu0 0.0
    %712 = vmatpush1.msra.mxu0 0.0
    %713 = vmatprep.subr.mxu0 0.0
    %714 = vmatpush1.msra.mxu0 0.0
    %715 = vmatprep.subr.mxu0 0.0
    %716 = vmatpush1.msra.mxu0 0.0
    %717 = vmatprep.subr.mxu0 0.0
    %718 = vmatpush1.msra.mxu0 0.0
    %719 = vmatprep.subr.mxu0 0.0
    %720 = vmatpush1.msra.mxu0 0.0
    %721 = vmatprep.subr.mxu0 0.0
    %722 = vmatpush1.msra.mxu0 0.0
    %723 = vmatprep.subr.mxu0 0.0
    %724 = vmatpush1.msra.mxu0 0.0
    %725 = vmatprep.subr.mxu0 0.0
    %726 = vmatpush1.msra.mxu0 %v204
    %727 = vmatprep.subr.mxu0 0.0
    %728 = vmatpush2.msra.mxu0 0.0
    %729 = vmatprep.subr.mxu0 0.0
    %730 = vmatpush2.msra.mxu0 0.0
    %731 = vmatprep.subr.mxu0 0.0
    %732 = vmatpush2.msra.mxu0 0.0
    %733 = vmatprep.subr.mxu0 0.0
    %734 = vmatpush2.msra.mxu0 0.0
    %735 = vmatprep.subr.mxu0 0.0
    %736 = vmatpush2.msra.mxu0 0.0
    %737 = vmatprep.subr.mxu0 0.0
    %738 = vmatpush2.msra.mxu0 0.0
    %739 = vmatprep.subr.mxu0 0.0
    %740 = vmatpush2.msra.mxu0 0.0
    %741 = vmatprep.subr.mxu0 0.0
    %742 = vmatpush2.msra.mxu0 0.0
    %743 = vmatprep.subr.mxu0 0.0
    %744 = vmatpush2.msra.mxu0 0.0
    %745 = vmatprep.subr.mxu0 0.0
    %746 = vmatpush2.msra.mxu0 0.0
    %747 = vmatprep.subr.mxu0 0.0
    %748 = vmatpush2.msra.mxu0 0.0
    %749 = vmatprep.subr.mxu0 0.0
    %750 = vmatpush2.msra.mxu0 0.0
    %751 = vmatprep.subr.mxu0 0.0
    %752 = vmatpush2.msra.mxu0 0.0
    %753 = vmatprep.subr.mxu0 0.0
    %754 = vmatpush2.msra.mxu0 0.0
    %755 = vmatprep.subr.mxu0 0.0
    %756 = vmatpush2.msra.mxu0 0.0
    %757 = vmatprep.subr.mxu0 0.0
    %758 = vmatpush2.msra.mxu0 0.0
    %759 = vmatprep.mubr.f32.mxu0 0.0
    %760 = vmatmul.mubr.f32.gmra.mxu0 %v690
    %v761 = vpop.f32.mrf.mxu0
    %v762 = vadd.f32 %v681, %v761
    %v763 = vpop.f32.mrf.mxu0
    %764 = vmatprep.mubr.f32.mxu0 0.0
    %765 = vmatmul.mubr.f32.gmra.mxu0 %v693
    %v766 = vpop.f32.mrf.mxu0
    %v767 = vadd.f32 %v686, %v766
    %v768 = vpop.f32.mrf.mxu0
    %769 = vdwg.mxu0
    %770 = vrot.lane.b32.xlu0 %v196, 112
    %v771 = vpop.permute.xlu0 %770
    %772 = vrot.lane.b32.xlu0 %v201, 112
    %v773 = vpop.permute.xlu0 %772
    %774 = vrot.lane.b32.xlu0 %v196, 80
    %v775 = vpop.permute.xlu0 %774
    %776 = vrot.lane.b32.xlu0 %v201, 80
    %v777 = vpop.permute.xlu0 %776
    %v778 = vsel %vm214, %v771, 0
    %v780 = vsel %vm214, %v773, 0
    %v782 = vsel %vm214, %v775, 0
    %v784 = vsel %vm214, %v777, 0
    %786 = vmatprep.subr.mxu0 0.0
    %787 = vmatpush1.xpose.msra.mxu0 0.0
    %788 = vmatprep.subr.mxu0 0.0
    %789 = vmatpush1.xpose.msra.mxu0 0.0
    %790 = vmatprep.subr.mxu0 0.0
    %791 = vmatpush1.xpose.msra.mxu0 0.0
    %792 = vmatprep.subr.mxu0 0.0
    %793 = vmatpush1.xpose.msra.mxu0 0.0
    %794 = vmatprep.subr.mxu0 0.0
    %795 = vmatpush1.xpose.msra.mxu0 0.0
    %796 = vmatprep.subr.mxu0 0.0
    %797 = vmatpush1.xpose.msra.mxu0 0.0
    %798 = vmatprep.subr.mxu0 0.0
    %799 = vmatpush1.xpose.msra.mxu0 0.0
    %800 = vmatprep.subr.mxu0 0.0
    %801 = vmatpush1.xpose.msra.mxu0 0.0
    %802 = vmatprep.subr.mxu0 0.0
    %803 = vmatpush1.xpose.msra.mxu0 0.0
    %804 = vmatprep.subr.mxu0 0.0
    %805 = vmatpush1.xpose.msra.mxu0 0.0
    %806 = vmatprep.subr.mxu0 0.0
    %807 = vmatpush1.xpose.msra.mxu0 0.0
    %808 = vmatprep.subr.mxu0 0.0
    %809 = vmatpush1.xpose.msra.mxu0 0.0
    %810 = vmatprep.subr.mxu0 0.0
    %811 = vmatpush1.xpose.msra.mxu0 0.0
    %812 = vmatprep.subr.mxu0 0.0
    %813 = vmatpush1.xpose.msra.mxu0 0.0
    %814 = vmatprep.subr.mxu0 0.0
    %815 = vmatpush1.xpose.msra.mxu0 %v784
    %816 = vmatprep.subr.mxu0 0.0
    %817 = vmatpush1.xpose.msra.mxu0 %v782
    %818 = vmatprep.subr.mxu0 0.0
    %819 = vmatpush2.xpose.msra.mxu0 0.0
    %820 = vmatprep.subr.mxu0 0.0
    %821 = vmatpush2.xpose.msra.mxu0 0.0
    %822 = vmatprep.subr.mxu0 0.0
    %823 = vmatpush2.xpose.msra.mxu0 0.0
    %824 = vmatprep.subr.mxu0 0.0
    %825 = vmatpush2.xpose.msra.mxu0 0.0
    %826 = vmatprep.subr.mxu0 0.0
    %827 = vmatpush2.xpose.msra.mxu0 0.0
    %828 = vmatprep.subr.mxu0 0.0
    %829 = vmatpush2.xpose.msra.mxu0 0.0
    %830 = vmatprep.subr.mxu0 0.0
    %831 = vmatpush2.xpose.msra.mxu0 0.0
    %832 = vmatprep.subr.mxu0 0.0
    %833 = vmatpush2.xpose.msra.mxu0 0.0
    %834 = vmatprep.subr.mxu0 0.0
    %835 = vmatpush2.xpose.msra.mxu0 0.0
    %836 = vmatprep.subr.mxu0 0.0
    %837 = vmatpush2.xpose.msra.mxu0 0.0
    %838 = vmatprep.subr.mxu0 0.0
    %839 = vmatpush2.xpose.msra.mxu0 0.0
    %840 = vmatprep.subr.mxu0 0.0
    %841 = vmatpush2.xpose.msra.mxu0 0.0
    %842 = vmatprep.subr.mxu0 0.0
    %843 = vmatpush2.xpose.msra.mxu0 0.0
    %844 = vmatprep.subr.mxu0 0.0
    %845 = vmatpush2.xpose.msra.mxu0 0.0
    %846 = vmatprep.subr.mxu0 0.0
    %847 = vmatpush2.xpose.msra.mxu0 0.0
    %848 = vmatprep.subr.mxu0 0.0
    %849 = vmatpush2.xpose.msra.mxu0 0.0
    %850 = vmatprep.mubr.f32.mxu0 0.0
    %851 = vmatmul.mubr.f32.gmra.mxu0 %v778
    %v852 = vpop.f32.mrf.mxu0
    %v853 = vadd.f32 %v111, %v852
    %v854 = vpop.f32.mrf.mxu0
    %855 = vmatprep.mubr.f32.mxu0 0.0
    %856 = vmatmul.mubr.f32.gmra.mxu0 %v780
    %v857 = vpop.f32.mrf.mxu0
    %v858 = vadd.f32 %v112, %v857
    %v859 = vpop.f32.mrf.mxu0
    %860 = vdwg.mxu0
    %v861 = vsel %vm298, %v853, -inf
    %862 = vmax.xlane.f32.xlu0 %v861
    %v863 = vpop.xlane.xlu0 %862
    %v864 = vsel %vm298, %v858, -inf
    %865 = vmax.xlane.f32.xlu0 %v864
    %v866 = vpop.xlane.xlu0 %865
    %v867 = vsub.f32 %v853, %v863
    %v868 = vsub.f32 %v858, %v866
    %v869 = vmul.f32 %v867, 1.442695
    %v870 = vpow.pop %v869
    %v871 = vmul.f32 %v868, 1.442695
    %v872 = vpow.pop %v871
    %v873 = vsel %vm298, %v870, 0.0
    %874 = vadd.xlane.f32.xlu0 %v873
    %v875 = vpop.xlane.xlu0 %874
    %v876 = vsel %vm298, %v872, 0.0
    %877 = vadd.xlane.f32.xlu0 %v876
    %v878 = vpop.xlane.xlu0 %877
    %v879 = vrcp.pop %v875
    %v880 = vrcp.pop %v878
    %v881 = vmul.f32 %v870, %v879
    %v882 = vmul.f32 %v872, %v880
    %883 = vrot.lane.b32.xlu0 %v196, 48
    %v884 = vpop.permute.xlu0 %883
    %885 = vrot.lane.b32.xlu0 %v201, 48
    %v886 = vpop.permute.xlu0 %885
    %v890 = vsel %vm298, %v881, 0
    %v893 = vsel %vm298, %v882, 0
    %895 = vmatprep.subr.mxu0 0.0
    %896 = vmatpush1.msra.mxu0 0.0
    %897 = vmatprep.subr.mxu0 0.0
    %898 = vmatpush1.msra.mxu0 0.0
    %899 = vmatprep.subr.mxu0 0.0
    %900 = vmatpush1.msra.mxu0 0.0
    %901 = vmatprep.subr.mxu0 0.0
    %902 = vmatpush1.msra.mxu0 0.0
    %903 = vmatprep.subr.mxu0 0.0
    %904 = vmatpush1.msra.mxu0 0.0
    %905 = vmatprep.subr.mxu0 0.0
    %906 = vmatpush1.msra.mxu0 0.0
    %907 = vmatprep.subr.mxu0 0.0
    %908 = vmatpush1.msra.mxu0 0.0
    %909 = vmatprep.subr.mxu0 0.0
    %910 = vmatpush1.msra.mxu0 0.0
    %911 = vmatprep.subr.mxu0 0.0
    %912 = vmatpush1.msra.mxu0 0.0
    %913 = vmatprep.subr.mxu0 0.0
    %914 = vmatpush1.msra.mxu0 0.0
    %915 = vmatprep.subr.mxu0 0.0
    %916 = vmatpush1.msra.mxu0 0.0
    %917 = vmatprep.subr.mxu0 0.0
    %918 = vmatpush1.msra.mxu0 0.0
    %919 = vmatprep.subr.mxu0 0.0
    %920 = vmatpush1.msra.mxu0 0.0
    %921 = vmatprep.subr.mxu0 0.0
    %922 = vmatpush1.msra.mxu0 0.0
    %923 = vmatprep.subr.mxu0 0.0
    %924 = vmatpush1.msra.mxu0 %v886
    %925 = vmatprep.subr.mxu0 0.0
    %926 = vmatpush1.msra.mxu0 %v884
    %927 = vmatprep.subr.mxu0 0.0
    %928 = vmatpush2.msra.mxu0 0.0
    %929 = vmatprep.subr.mxu0 0.0
    %930 = vmatpush2.msra.mxu0 0.0
    %931 = vmatprep.subr.mxu0 0.0
    %932 = vmatpush2.msra.mxu0 0.0
    %933 = vmatprep.subr.mxu0 0.0
    %934 = vmatpush2.msra.mxu0 0.0
    %935 = vmatprep.subr.mxu0 0.0
    %936 = vmatpush2.msra.mxu0 0.0
    %937 = vmatprep.subr.mxu0 0.0
    %938 = vmatpush2.msra.mxu0 0.0
    %939 = vmatprep.subr.mxu0 0.0
    %940 = vmatpush2.msra.mxu0 0.0
    %941 = vmatprep.subr.mxu0 0.0
    %942 = vmatpush2.msra.mxu0 0.0
    %943 = vmatprep.subr.mxu0 0.0
    %944 = vmatpush2.msra.mxu0 0.0
    %945 = vmatprep.subr.mxu0 0.0
    %946 = vmatpush2.msra.mxu0 0.0
    %947 = vmatprep.subr.mxu0 0.0
    %948 = vmatpush2.msra.mxu0 0.0
    %949 = vmatprep.subr.mxu0 0.0
    %950 = vmatpush2.msra.mxu0 0.0
    %951 = vmatprep.subr.mxu0 0.0
    %952 = vmatpush2.msra.mxu0 0.0
    %953 = vmatprep.subr.mxu0 0.0
    %954 = vmatpush2.msra.mxu0 0.0
    %955 = vmatprep.subr.mxu0 0.0
    %956 = vmatpush2.msra.mxu0 0.0
    %957 = vmatprep.subr.mxu0 0.0
    %958 = vmatpush2.msra.mxu0 0.0
    %959 = vmatprep.mubr.f32.mxu0 0.0
    %960 = vmatmul.mubr.f32.gmra.mxu0 %v890
    %v961 = vpop.f32.mrf.mxu0
    %v962 = vadd.f32 0.0, %v961
    %v963 = vpop.f32.mrf.mxu0
    %964 = vmatprep.mubr.f32.mxu0 0.0
    %965 = vmatmul.mubr.f32.gmra.mxu0 %v893
    %v966 = vpop.f32.mrf.mxu0
    %v967 = vadd.f32 0.0, %v966
    %v968 = vpop.f32.mrf.mxu0
    %969 = vdwg.mxu0
    %v971 = vsel %vm214, %v962, 0
    %v974 = vsel %vm214, %v967, 0
    %976 = vmatprep.subr.mxu0 0.0
    %977 = vmatpush1.msra.mxu0 0.0
    %978 = vmatprep.subr.mxu0 0.0
    %979 = vmatpush1.msra.mxu0 0.0
    %980 = vmatprep.subr.mxu0 0.0
    %981 = vmatpush1.msra.mxu0 0.0
    %982 = vmatprep.subr.mxu0 0.0
    %983 = vmatpush1.msra.mxu0 0.0
    %984 = vmatprep.subr.mxu0 0.0
    %985 = vmatpush1.msra.mxu0 0.0
    %986 = vmatprep.subr.mxu0 0.0
    %987 = vmatpush1.msra.mxu0 0.0
    %988 = vmatprep.subr.mxu0 0.0
    %989 = vmatpush1.msra.mxu0 0.0
    %990 = vmatprep.subr.mxu0 0.0
    %991 = vmatpush1.msra.mxu0 0.0
    %992 = vmatprep.subr.mxu0 0.0
    %993 = vmatpush1.msra.mxu0 0.0
    %994 = vmatprep.subr.mxu0 0.0
    %995 = vmatpush1.msra.mxu0 0.0
    %996 = vmatprep.subr.mxu0 0.0
    %997 = vmatpush1.msra.mxu0 0.0
    %998 = vmatprep.subr.mxu0 0.0
    %999 = vmatpush1.msra.mxu0 0.0
    %1000 = vmatprep.subr.mxu0 0.0
    %1001 = vmatpush1.msra.mxu0 0.0
    %1002 = vmatprep.subr.mxu0 0.0
    %1003 = vmatpush1.msra.mxu0 0.0
    %1004 = vmatprep.subr.mxu0 0.0
    %1005 = vmatpush1.msra.mxu0 0.0
    %1006 = vmatprep.subr.mxu0 0.0
    %1007 = vmatpush1.msra.mxu0 %v206
    %1008 = vmatprep.subr.mxu0 0.0
    %1009 = vmatpush2.msra.mxu0 0.0
    %1010 = vmatprep.subr.mxu0 0.0
    %1011 = vmatpush2.msra.mxu0 0.0
    %1012 = vmatprep.subr.mxu0 0.0
    %1013 = vmatpush2.msra.mxu0 0.0
    %1014 = vmatprep.subr.mxu0 0.0
    %1015 = vmatpush2.msra.mxu0 0.0
    %1016 = vmatprep.subr.mxu0 0.0
    %1017 = vmatpush2.msra.mxu0 0.0
    %1018 = vmatprep.subr.mxu0 0.0
    %1019 = vmatpush2.msra.mxu0 0.0
    %1020 = vmatprep.subr.mxu0 0.0
    %1021 = vmatpush2.msra.mxu0 0.0
    %1022 = vmatprep.subr.mxu0 0.0
    %1023 = vmatpush2.msra.mxu0 0.0
    %1024 = vmatprep.subr.mxu0 0.0
    %1025 = vmatpush2.msra.mxu0 0.0
    %1026 = vmatprep.subr.mxu0 0.0
    %1027 = vmatpush2.msra.mxu0 0.0
    %1028 = vmatprep.subr.mxu0 0.0
    %1029 = vmatpush2.msra.mxu0 0.0
    %1030 = vmatprep.subr.mxu0 0.0
    %1031 = vmatpush2.msra.mxu0 0.0
    %1032 = vmatprep.subr.mxu0 0.0
    %1033 = vmatpush2.msra.mxu0 0.0
    %1034 = vmatprep.subr.mxu0 0.0
    %1035 = vmatpush2.msra.mxu0 0.0
    %1036 = vmatprep.subr.mxu0 0.0
    %1037 = vmatpush2.msra.mxu0 0.0
    %1038 = vmatprep.subr.mxu0 0.0
    %1039 = vmatpush2.msra.mxu0 0.0
    %1040 = vmatprep.mubr.f32.mxu0 0.0
    %1041 = vmatmul.mubr.f32.gmra.mxu0 %v971
    %v1042 = vpop.f32.mrf.mxu0
    %v1043 = vadd.f32 0.0, %v1042
    %v1044 = vpop.f32.mrf.mxu0
    %1045 = vmatprep.mubr.f32.mxu0 0.0
    %1046 = vmatmul.mubr.f32.gmra.mxu0 %v974
    %v1047 = vpop.f32.mrf.mxu0
    %v1048 = vadd.f32 0.0, %v1047
    %v1049 = vpop.f32.mrf.mxu0
    %1050 = vdwg.mxu0
    %v1051 = vadd.f32 %v762, %v1043
    %v1052 = vadd.f32 %v767, %v1048
    %1053 = vrot.lane.b32.xlu0 %v196, 104
    %v1054 = vpop.permute.xlu0 %1053
    %1055 = vrot.lane.b32.xlu0 %v201, 104
    %v1056 = vpop.permute.xlu0 %1055
    %1057 = vrot.lane.b32.xlu0 %v196, 72
    %v1058 = vpop.permute.xlu0 %1057
    %1059 = vrot.lane.b32.xlu0 %v201, 72
    %v1060 = vpop.permute.xlu0 %1059
    %v1061 = vsel %vm214, %v1054, 0
    %v1063 = vsel %vm214, %v1056, 0
    %v1065 = vsel %vm214, %v1058, 0
    %v1067 = vsel %vm214, %v1060, 0
    %1069 = vmatprep.subr.mxu0 0.0
    %1070 = vmatpush1.xpose.msra.mxu0 0.0
    %1071 = vmatprep.subr.mxu0 0.0
    %1072 = vmatpush1.xpose.msra.mxu0 0.0
    %1073 = vmatprep.subr.mxu0 0.0
    %1074 = vmatpush1.xpose.msra.mxu0 0.0
    %1075 = vmatprep.subr.mxu0 0.0
    %1076 = vmatpush1.xpose.msra.mxu0 0.0
    %1077 = vmatprep.subr.mxu0 0.0
    %1078 = vmatpush1.xpose.msra.mxu0 0.0
    %1079 = vmatprep.subr.mxu0 0.0
    %1080 = vmatpush1.xpose.msra.mxu0 0.0
    %1081 = vmatprep.subr.mxu0 0.0
    %1082 = vmatpush1.xpose.msra.mxu0 0.0
    %1083 = vmatprep.subr.mxu0 0.0
    %1084 = vmatpush1.xpose.msra.mxu0 0.0
    %1085 = vmatprep.subr.mxu0 0.0
    %1086 = vmatpush1.xpose.msra.mxu0 0.0
    %1087 = vmatprep.subr.mxu0 0.0
    %1088 = vmatpush1.xpose.msra.mxu0 0.0
    %1089 = vmatprep.subr.mxu0 0.0
    %1090 = vmatpush1.xpose.msra.mxu0 0.0
    %1091 = vmatprep.subr.mxu0 0.0
    %1092 = vmatpush1.xpose.msra.mxu0 0.0
    %1093 = vmatprep.subr.mxu0 0.0
    %1094 = vmatpush1.xpose.msra.mxu0 0.0
    %1095 = vmatprep.subr.mxu0 0.0
    %1096 = vmatpush1.xpose.msra.mxu0 0.0
    %1097 = vmatprep.subr.mxu0 0.0
    %1098 = vmatpush1.xpose.msra.mxu0 %v1067
    %1099 = vmatprep.subr.mxu0 0.0
    %1100 = vmatpush1.xpose.msra.mxu0 %v1065
    %1101 = vmatprep.subr.mxu0 0.0
    %1102 = vmatpush2.xpose.msra.mxu0 0.0
    %1103 = vmatprep.subr.mxu0 0.0
    %1104 = vmatpush2.xpose.msra.mxu0 0.0
    %1105 = vmatprep.subr.mxu0 0.0
    %1106 = vmatpush2.xpose.msra.mxu0 0.0
    %1107 = vmatprep.subr.mxu0 0.0
    %1108 = vmatpush2.xpose.msra.mxu0 0.0
    %1109 = vmatprep.subr.mxu0 0.0
    %1110 = vmatpush2.xpose.msra.mxu0 0.0
    %1111 = vmatprep.subr.mxu0 0.0
    %1112 = vmatpush2.xpose.msra.mxu0 0.0
    %1113 = vmatprep.subr.mxu0 0.0
    %1114 = vmatpush2.xpose.msra.mxu0 0.0
    %1115 = vmatprep.subr.mxu0 0.0
    %1116 = vmatpush2.xpose.msra.mxu0 0.0
    %1117 = vmatprep.subr.mxu0 0.0
    %1118 = vmatpush2.xpose.msra.mxu0 0.0
    %1119 = vmatprep.subr.mxu0 0.0
    %1120 = vmatpush2.xpose.msra.mxu0 0.0
    %1121 = vmatprep.subr.mxu0 0.0
    %1122 = vmatpush2.xpose.msra.mxu0 0.0
    %1123 = vmatprep.subr.mxu0 0.0
    %1124 = vmatpush2.xpose.msra.mxu0 0.0
    %1125 = vmatprep.subr.mxu0 0.0
    %1126 = vmatpush2.xpose.msra.mxu0 0.0
    %1127 = vmatprep.subr.mxu0 0.0
    %1128 = vmatpush2.xpose.msra.mxu0 0.0
    %1129 = vmatprep.subr.mxu0 0.0
    %1130 = vmatpush2.xpose.msra.mxu0 0.0
    %1131 = vmatprep.subr.mxu0 0.0
    %1132 = vmatpush2.xpose.msra.mxu0 0.0
    %1133 = vmatprep.mubr.f32.mxu0 0.0
    %1134 = vmatmul.mubr.f32.gmra.mxu0 %v1061
    %v1135 = vpop.f32.mrf.mxu0
    %v1136 = vadd.f32 %v111, %v1135
    %v1137 = vpop.f32.mrf.mxu0
    %1138 = vmatprep.mubr.f32.mxu0 0.0
    %1139 = vmatmul.mubr.f32.gmra.mxu0 %v1063
    %v1140 = vpop.f32.mrf.mxu0
    %v1141 = vadd.f32 %v112, %v1140
    %v1142 = vpop.f32.mrf.mxu0
    %1143 = vdwg.mxu0
    %v1144 = vsel %vm298, %v1136, -inf
    %1145 = vmax.xlane.f32.xlu0 %v1144
    %v1146 = vpop.xlane.xlu0 %1145
    %v1147 = vsel %vm298, %v1141, -inf
    %1148 = vmax.xlane.f32.xlu0 %v1147
    %v1149 = vpop.xlane.xlu0 %1148
    %v1150 = vsub.f32 %v1136, %v1146
    %v1151 = vsub.f32 %v1141, %v1149
    %v1152 = vmul.f32 %v1150, 1.442695
    %v1153 = vpow.pop %v1152
    %v1154 = vmul.f32 %v1151, 1.442695
    %v1155 = vpow.pop %v1154
    %v1156 = vsel %vm298, %v1153, 0.0
    %1157 = vadd.xlane.f32.xlu0 %v1156
    %v1158 = vpop.xlane.xlu0 %1157
    %v1159 = vsel %vm298, %v1155, 0.0
    %1160 = vadd.xlane.f32.xlu0 %v1159
    %v1161 = vpop.xlane.xlu0 %1160
    %v1162 = vrcp.pop %v1158
    %v1163 = vrcp.pop %v1161
    %v1164 = vmul.f32 %v1153, %v1162
    %v1165 = vmul.f32 %v1155, %v1163
    %1166 = vrot.lane.b32.xlu0 %v196, 40
    %v1167 = vpop.permute.xlu0 %1166
    %1168 = vrot.lane.b32.xlu0 %v201, 40
    %v1169 = vpop.permute.xlu0 %1168
    %v1173 = vsel %vm298, %v1164, 0
    %v1176 = vsel %vm298, %v1165, 0
    %1178 = vmatprep.subr.mxu0 0.0
    %1179 = vmatpush1.msra.mxu0 0.0
    %1180 = vmatprep.subr.mxu0 0.0
    %1181 = vmatpush1.msra.mxu0 0.0
    %1182 = vmatprep.subr.mxu0 0.0
    %1183 = vmatpush1.msra.mxu0 0.0
    %1184 = vmatprep.subr.mxu0 0.0
    %1185 = vmatpush1.msra.mxu0 0.0
    %1186 = vmatprep.subr.mxu0 0.0
    %1187 = vmatpush1.msra.mxu0 0.0
    %1188 = vmatprep.subr.mxu0 0.0
    %1189 = vmatpush1.msra.mxu0 0.0
    %1190 = vmatprep.subr.mxu0 0.0
    %1191 = vmatpush1.msra.mxu0 0.0
    %1192 = vmatprep.subr.mxu0 0.0
    %1193 = vmatpush1.msra.mxu0 0.0
    %1194 = vmatprep.subr.mxu0 0.0
    %1195 = vmatpush1.msra.mxu0 0.0
    %1196 = vmatprep.subr.mxu0 0.0
    %1197 = vmatpush1.msra.mxu0 0.0
    %1198 = vmatprep.subr.mxu0 0.0
    %1199 = vmatpush1.msra.mxu0 0.0
    %1200 = vmatprep.subr.mxu0 0.0
    %1201 = vmatpush1.msra.mxu0 0.0
    %1202 = vmatprep.subr.mxu0 0.0
    %1203 = vmatpush1.msra.mxu0 0.0
    %1204 = vmatprep.subr.mxu0 0.0
    %1205 = vmatpush1.msra.mxu0 0.0
    %1206 = vmatprep.subr.mxu0 0.0
    %1207 = vmatpush1.msra.mxu0 %v1169
    %1208 = vmatprep.subr.mxu0 0.0
    %1209 = vmatpush1.msra.mxu0 %v1167
    %1210 = vmatprep.subr.mxu0 0.0
    %1211 = vmatpush2.msra.mxu0 0.0
    %1212 = vmatprep.subr.mxu0 0.0
    %1213 = vmatpush2.msra.mxu0 0.0
    %1214 = vmatprep.subr.mxu0 0.0
    %1215 = vmatpush2.msra.mxu0 0.0
    %1216 = vmatprep.subr.mxu0 0.0
    %1217 = vmatpush2.msra.mxu0 0.0
    %1218 = vmatprep.subr.mxu0 0.0
    %1219 = vmatpush2.msra.mxu0 0.0
    %1220 = vmatprep.subr.mxu0 0.0
    %1221 = vmatpush2.msra.mxu0 0.0
    %1222 = vmatprep.subr.mxu0 0.0
    %1223 = vmatpush2.msra.mxu0 0.0
    %1224 = vmatprep.subr.mxu0 0.0
    %1225 = vmatpush2.msra.mxu0 0.0
    %1226 = vmatprep.subr.mxu0 0.0
    %1227 = vmatpush2.msra.mxu0 0.0
    %1228 = vmatprep.subr.mxu0 0.0
    %1229 = vmatpush2.msra.mxu0 0.0
    %1230 = vmatprep.subr.mxu0 0.0
    %1231 = vmatpush2.msra.mxu0 0.0
    %1232 = vmatprep.subr.mxu0 0.0
    %1233 = vmatpush2.msra.mxu0 0.0
    %1234 = vmatprep.subr.mxu0 0.0
    %1235 = vmatpush2.msra.mxu0 0.0
    %1236 = vmatprep.subr.mxu0 0.0
    %1237 = vmatpush2.msra.mxu0 0.0
    %1238 = vmatprep.subr.mxu0 0.0
    %1239 = vmatpush2.msra.mxu0 0.0
    %1240 = vmatprep.subr.mxu0 0.0
    %1241 = vmatpush2.msra.mxu0 0.0
    %1242 = vmatprep.mubr.f32.mxu0 0.0
    %1243 = vmatmul.mubr.f32.gmra.mxu0 %v1173
    %v1244 = vpop.f32.mrf.mxu0
    %v1245 = vadd.f32 0.0, %v1244
    %v1246 = vpop.f32.mrf.mxu0
    %1247 = vmatprep.mubr.f32.mxu0 0.0
    %1248 = vmatmul.mubr.f32.gmra.mxu0 %v1176
    %v1249 = vpop.f32.mrf.mxu0
    %v1250 = vadd.f32 0.0, %v1249
    %v1251 = vpop.f32.mrf.mxu0
    %1252 = vdwg.mxu0
    %v1254 = vsel %vm214, %v1245, 0
    %v1257 = vsel %vm214, %v1250, 0
    %1259 = vmatprep.subr.mxu0 0.0
    %1260 = vmatpush1.msra.mxu0 0.0
    %1261 = vmatprep.subr.mxu0 0.0
    %1262 = vmatpush1.msra.mxu0 0.0
    %1263 = vmatprep.subr.mxu0 0.0
    %1264 = vmatpush1.msra.mxu0 0.0
    %1265 = vmatprep.subr.mxu0 0.0
    %1266 = vmatpush1.msra.mxu0 0.0
    %1267 = vmatprep.subr.mxu0 0.0
    %1268 = vmatpush1.msra.mxu0 0.0
    %1269 = vmatprep.subr.mxu0 0.0
    %1270 = vmatpush1.msra.mxu0 0.0
    %1271 = vmatprep.subr.mxu0 0.0
    %1272 = vmatpush1.msra.mxu0 0.0
    %1273 = vmatprep.subr.mxu0 0.0
    %1274 = vmatpush1.msra.mxu0 0.0
    %1275 = vmatprep.subr.mxu0 0.0
    %1276 = vmatpush1.msra.mxu0 0.0
    %1277 = vmatprep.subr.mxu0 0.0
    %1278 = vmatpush1.msra.mxu0 0.0
    %1279 = vmatprep.subr.mxu0 0.0
    %1280 = vmatpush1.msra.mxu0 0.0
    %1281 = vmatprep.subr.mxu0 0.0
    %1282 = vmatpush1.msra.mxu0 0.0
    %1283 = vmatprep.subr.mxu0 0.0
    %1284 = vmatpush1.msra.mxu0 0.0
    %1285 = vmatprep.subr.mxu0 0.0
    %1286 = vmatpush1.msra.mxu0 0.0
    %1287 = vmatprep.subr.mxu0 0.0
    %1288 = vmatpush1.msra.mxu0 0.0
    %1289 = vmatprep.subr.mxu0 0.0
    %1290 = vmatpush1.msra.mxu0 %v207
    %1291 = vmatprep.subr.mxu0 0.0
    %1292 = vmatpush2.msra.mxu0 0.0
    %1293 = vmatprep.subr.mxu0 0.0
    %1294 = vmatpush2.msra.mxu0 0.0
    %1295 = vmatprep.subr.mxu0 0.0
    %1296 = vmatpush2.msra.mxu0 0.0
    %1297 = vmatprep.subr.mxu0 0.0
    %1298 = vmatpush2.msra.mxu0 0.0
    %1299 = vmatprep.subr.mxu0 0.0
    %1300 = vmatpush2.msra.mxu0 0.0
    %1301 = vmatprep.subr.mxu0 0.0
    %1302 = vmatpush2.msra.mxu0 0.0
    %1303 = vmatprep.subr.mxu0 0.0
    %1304 = vmatpush2.msra.mxu0 0.0
    %1305 = vmatprep.subr.mxu0 0.0
    %1306 = vmatpush2.msra.mxu0 0.0
    %1307 = vmatprep.subr.mxu0 0.0
    %1308 = vmatpush2.msra.mxu0 0.0
    %1309 = vmatprep.subr.mxu0 0.0
    %1310 = vmatpush2.msra.mxu0 0.0
    %1311 = vmatprep.subr.mxu0 0.0
    %1312 = vmatpush2.msra.mxu0 0.0
    %1313 = vmatprep.subr.mxu0 0.0
    %1314 = vmatpush2.msra.mxu0 0.0
    %1315 = vmatprep.subr.mxu0 0.0
    %1316 = vmatpush2.msra.mxu0 0.0
    %1317 = vmatprep.subr.mxu0 0.0
    %1318 = vmatpush2.msra.mxu0 0.0
    %1319 = vmatprep.subr.mxu0 0.0
    %1320 = vmatpush2.msra.mxu0 0.0
    %1321 = vmatprep.subr.mxu0 0.0
    %1322 = vmatpush2.msra.mxu0 0.0
    %1323 = vmatprep.mubr.f32.mxu0 0.0
    %1324 = vmatmul.mubr.f32.gmra.mxu0 %v1254
    %v1325 = vpop.f32.mrf.mxu0
    %v1326 = vadd.f32 0.0, %v1325
    %v1327 = vpop.f32.mrf.mxu0
    %1328 = vmatprep.mubr.f32.mxu0 0.0
    %1329 = vmatmul.mubr.f32.gmra.mxu0 %v1257
    %v1330 = vpop.f32.mrf.mxu0
    %v1331 = vadd.f32 0.0, %v1330
    %v1332 = vpop.f32.mrf.mxu0
    %1333 = vdwg.mxu0
    %v1334 = vadd.f32 %v1051, %v1326
    %v1335 = vadd.f32 %v1052, %v1331
    %v1336 = vlaneseq
    %v1337 = vshrl.u32 %v1336, 7
    %v1338 = vsub.s32 1, %v1337
    %v1339 = vrot.slane %v113, %v1338
    %v1340 = vadd.f32 %v1334, %v1339
    %v1341 = vadd.f32 %v1335, %v1339
    %v1342 = vadd.f32 %v109, %v1340
    %v1343 = vadd.f32 %v110, %v1341
    %v1344 = vsel %vm122, %v1342, 0.0
    %1345 = vadd.xlane.f32.xlu0 %v1344
    %v1346 = vpop.xlane.xlu0 %1345
    %v1347 = vsel %vm122, %v1343, 0.0
    %1348 = vadd.xlane.f32.xlu0 %v1347
    %v1349 = vpop.xlane.xlu0 %1348
    %v1350 = vrcp.pop 32.0
    %v1351 = vmul.f32 %v1346, %v1350
    %v1352 = vmul.f32 %v1349, %v1350
    %v1353 = vsub.f32 %v1342, %v1351
    %v1354 = vsub.f32 %v1343, %v1352
    %v1355 = vmul.f32 %v1353, %v1353
    %v1356 = vmul.f32 %v1354, %v1354
    %v1357 = vsel %vm122, %v1355, 0.0
    %1358 = vadd.xlane.f32.xlu0 %v1357
    %v1359 = vpop.xlane.xlu0 %1358
    %v1360 = vsel %vm122, %v1356, 0.0
    %1361 = vadd.xlane.f32.xlu0 %v1360
    %v1362 = vpop.xlane.xlu0 %1361
    %v1363 = vmul.f32 %v1359, %v1350
    %v1364 = vmul.f32 %v1362, %v1350
    %v1365 = vadd.f32 %v1363, 1e-05
    %v1366 = vadd.f32 %v1364, 1e-05
    %v1367 = vrsqrt.pop %v1365
    %v1368 = vrsqrt.pop %v1366
    %v1369 = vmul.f32 %v1353, %v1367
    %v1370 = vmul.f32 %v1354, %v1368
    %v1371 = vlaneseq
    %v1372 = vshrl.u32 %v1371, 7
    %v1373 = vsub.s32 2, %v1372
    %v1374 = vrot.slane %v113, %v1373
    %v1375 = vmul.f32 %v1369, %v1374
    %v1376 = vmul.f32 %v1370, %v1374
    %v1377 = vlaneseq
    %v1378 = vshrl.u32 %v1377, 7
    %v1379 = vsub.s32 3, %v1378
    %v1380 = vrot.slane %v113, %v1379
    %v1381 = vadd.f32 %v1375, %v1380
    %v1382 = vadd.f32 %v1376, %v1380
    %v1383 = vld [vmem:[#allocation10] sm:$0xff]
    %v1384 = vld [vmem:[#allocation10 + $0x8] sm:$0xff]
    %v1385 = vld [vmem:[#allocation10 + $0x10] sm:$0xff]
    %v1386 = vld [vmem:[#allocation10 + $0x18] sm:$0xff]
    %v1387 = vlaneseq
    %v1388 = vshrl.u32 %v1387, 7
    %v1389 = vsub.s32 4, %v1388
    %v1390 = vrot.slane %v113, %v1389
    %v1392 = vsel %vm122, %v1381, 0
    %v1395 = vsel %vm122, %v1382, 0
    %1397 = vmatprep.subr.mxu0 0.0
    %1398 = vmatpush1.msra.mxu0 0.0
    %1399 = vmatprep.subr.mxu0 0.0
    %1400 = vmatpush1.msra.mxu0 0.0
    %1401 = vmatprep.subr.mxu0 0.0
    %1402 = vmatpush1.msra.mxu0 0.0
    %1403 = vmatprep.subr.mxu0 0.0
    %1404 = vmatpush1.msra.mxu0 0.0
    %1405 = vmatprep.subr.mxu0 0.0
    %1406 = vmatpush1.msra.mxu0 0.0
    %1407 = vmatprep.subr.mxu0 0.0
    %1408 = vmatpush1.msra.mxu0 0.0
    %1409 = vmatprep.subr.mxu0 0.0
    %1410 = vmatpush1.msra.mxu0 0.0
    %1411 = vmatprep.subr.mxu0 0.0
    %1412 = vmatpush1.msra.mxu0 0.0
    %1413 = vmatprep.subr.mxu0 0.0
    %1414 = vmatpush1.msra.mxu0 0.0
    %1415 = vmatprep.subr.mxu0 0.0
    %1416 = vmatpush1.msra.mxu0 0.0
    %1417 = vmatprep.subr.mxu0 0.0
    %1418 = vmatpush1.msra.mxu0 0.0
    %1419 = vmatprep.subr.mxu0 0.0
    %1420 = vmatpush1.msra.mxu0 0.0
    %1421 = vmatprep.subr.mxu0 0.0
    %1422 = vmatpush1.msra.mxu0 %v1386
    %1423 = vmatprep.subr.mxu0 0.0
    %1424 = vmatpush1.msra.mxu0 %v1385
    %1425 = vmatprep.subr.mxu0 0.0
    %1426 = vmatpush1.msra.mxu0 %v1384
    %1427 = vmatprep.subr.mxu0 0.0
    %1428 = vmatpush1.msra.mxu0 %v1383
    %1429 = vmatprep.subr.mxu0 0.0
    %1430 = vmatpush2.msra.mxu0 0.0
    %1431 = vmatprep.subr.mxu0 0.0
    %1432 = vmatpush2.msra.mxu0 0.0
    %1433 = vmatprep.subr.mxu0 0.0
    %1434 = vmatpush2.msra.mxu0 0.0
    %1435 = vmatprep.subr.mxu0 0.0
    %1436 = vmatpush2.msra.mxu0 0.0
    %1437 = vmatprep.subr.mxu0 0.0
    %1438 = vmatpush2.msra.mxu0 0.0
    %1439 = vmatprep.subr.mxu0 0.0
    %1440 = vmatpush2.msra.mxu0 0.0
    %1441 = vmatprep.subr.mxu0 0.0
    %1442 = vmatpush2.msra.mxu0 0.0
    %1443 = vmatprep.subr.mxu0 0.0
    %1444 = vmatpush2.msra.mxu0 0.0
    %1445 = vmatprep.subr.mxu0 0.0
    %1446 = vmatpush2.msra.mxu0 0.0
    %1447 = vmatprep.subr.mxu0 0.0
    %1448 = vmatpush2.msra.mxu0 0.0
    %1449 = vmatprep.subr.mxu0 0.0
    %1450 = vmatpush2.msra.mxu0 0.0
    %1451 = vmatprep.subr.mxu0 0.0
    %1452 = vmatpush2.msra.mxu0 0.0
    %1453 = vmatprep.subr.mxu0 0.0
    %1454 = vmatpush2.msra.mxu0 0.0
    %1455 = vmatprep.subr.mxu0 0.0
    %1456 = vmatpush2.msra.mxu0 0.0
    %1457 = vmatprep.subr.mxu0 0.0
    %1458 = vmatpush2.msra.mxu0 0.0
    %1459 = vmatprep.subr.mxu0 0.0
    %1460 = vmatpush2.msra.mxu0 0.0
    %1461 = vmatprep.mubr.f32.mxu0 0.0
    %1462 = vmatmul.mubr.f32.gmra.mxu0 %v1392
    %v1463 = vpop.f32.mrf.mxu0
    %v1464 = vadd.f32 %v1390, %v1463
    %v1465 = vpop.f32.mrf.mxu0
    %1466 = vmatprep.mubr.f32.mxu0 0.0
    %1467 = vmatmul.mubr.f32.gmra.mxu0 %v1395
    %v1468 = vpop.f32.mrf.mxu0
    %v1469 = vadd.f32 %v1390, %v1468
    %v1470 = vpop.f32.mrf.mxu0
    %1471 = vdwg.mxu0
    %v1472 = vmax.f32 %v1464, 0.0
    %v1473 = vmax.f32 %v1469, 0.0
    %v1474 = vld [vmem:[#allocation11] sm:$0xff]
    %v1475 = vld [vmem:[#allocation11 + $0x8] sm:$0xff]
    %v1476 = vld [vmem:[#allocation11 + $0x10] sm:$0xff]
    %v1477 = vld [vmem:[#allocation11 + $0x18] sm:$0xff]
    %v1478 = vld [vmem:[#allocation11 + $0x20] sm:$0xff]
    %v1479 = vld [vmem:[#allocation11 + $0x28] sm:$0xff]
    %v1480 = vld [vmem:[#allocation11 + $0x30] sm:$0xff]
    %v1481 = vld [vmem:[#allocation11 + $0x38] sm:$0xff]
    %v1482 = vlaneseq
    %v1483 = vshrl.u32 %v1482, 7
    %v1484 = vsub.s32 5, %v1483
    %v1485 = vrot.slane %v113, %v1484
    %vm1486 = vcmask 523264
    %v1488 = vsel %vm1486, %v1472, 0
    %v1491 = vsel %vm1486, %v1473, 0
    %1493 = vmatprep.subr.mxu0 0.0
    %1494 = vmatpush1.msra.mxu0 0.0
    %1495 = vmatprep.subr.mxu0 0.0
    %1496 = vmatpush1.msra.mxu0 0.0
    %1497 = vmatprep.subr.mxu0 0.0
    %1498 = vmatpush1.msra.mxu0 0.0
    %1499 = vmatprep.subr.mxu0 0.0
    %1500 = vmatpush1.msra.mxu0 0.0
    %1501 = vmatprep.subr.mxu0 0.0
    %1502 = vmatpush1.msra.mxu0 0.0
    %1503 = vmatprep.subr.mxu0 0.0
    %1504 = vmatpush1.msra.mxu0 0.0
    %1505 = vmatprep.subr.mxu0 0.0
    %1506 = vmatpush1.msra.mxu0 0.0
    %1507 = vmatprep.subr.mxu0 0.0
    %1508 = vmatpush1.msra.mxu0 0.0
    %1509 = vmatprep.subr.mxu0 0.0
    %1510 = vmatpush1.msra.mxu0 %v1481
    %1511 = vmatprep.subr.mxu0 0.0
    %1512 = vmatpush1.msra.mxu0 %v1480
    %1513 = vmatprep.subr.mxu0 0.0
    %1514 = vmatpush1.msra.mxu0 %v1479
    %1515 = vmatprep.subr.mxu0 0.0
    %1516 = vmatpush1.msra.mxu0 %v1478
    %1517 = vmatprep.subr.mxu0 0.0
    %1518 = vmatpush1.msra.mxu0 %v1477
    %1519 = vmatprep.subr.mxu0 0.0
    %1520 = vmatpush1.msra.mxu0 %v1476
    %1521 = vmatprep.subr.mxu0 0.0
    %1522 = vmatpush1.msra.mxu0 %v1475
    %1523 = vmatprep.subr.mxu0 0.0
    %1524 = vmatpush1.msra.mxu0 %v1474
    %1525 = vmatprep.subr.mxu0 0.0
    %1526 = vmatpush2.msra.mxu0 0.0
    %1527 = vmatprep.subr.mxu0 0.0
    %1528 = vmatpush2.msra.mxu0 0.0
    %1529 = vmatprep.subr.mxu0 0.0
    %1530 = vmatpush2.msra.mxu0 0.0
    %1531 = vmatprep.subr.mxu0 0.0
    %1532 = vmatpush2.msra.mxu0 0.0
    %1533 = vmatprep.subr.mxu0 0.0
    %1534 = vmatpush2.msra.mxu0 0.0
    %1535 = vmatprep.subr.mxu0 0.0
    %1536 = vmatpush2.msra.mxu0 0.0
    %1537 = vmatprep.subr.mxu0 0.0
    %1538 = vmatpush2.msra.mxu0 0.0
    %1539 = vmatprep.subr.mxu0 0.0
    %1540 = vmatpush2.msra.mxu0 0.0
    %1541 = vmatprep.subr.mxu0 0.0
    %1542 = vmatpush2.msra.mxu0 0.0
    %1543 = vmatprep.subr.mxu0 0.0
    %1544 = vmatpush2.msra.mxu0 0.0
    %1545 = vmatprep.subr.mxu0 0.0
    %1546 = vmatpush2.msra.mxu0 0.0
    %1547 = vmatprep.subr.mxu0 0.0
    %1548 = vmatpush2.msra.mxu0 0.0
    %1549 = vmatprep.subr.mxu0 0.0
    %1550 = vmatpush2.msra.mxu0 0.0
    %1551 = vmatprep.subr.mxu0 0.0
    %1552 = vmatpush2.msra.mxu0 0.0
    %1553 = vmatprep.subr.mxu0 0.0
    %1554 = vmatpush2.msra.mxu0 0.0
    %1555 = vmatprep.subr.mxu0 0.0
    %1556 = vmatpush2.msra.mxu0 0.0
    %1557 = vmatprep.mubr.f32.mxu0 0.0
    %1558 = vmatmul.mubr.f32.gmra.mxu0 %v1488
    %v1559 = vpop.f32.mrf.mxu0
    %v1560 = vadd.f32 %v1485, %v1559
    %v1561 = vpop.f32.mrf.mxu0
    %1562 = vmatprep.mubr.f32.mxu0 0.0
    %1563 = vmatmul.mubr.f32.gmra.mxu0 %v1491
    %v1564 = vpop.f32.mrf.mxu0
    %v1565 = vadd.f32 %v1485, %v1564
    %v1566 = vpop.f32.mrf.mxu0
    %1567 = vdwg.mxu0
    %v1568 = vadd.f32 %v1381, %v1560
    %v1569 = vadd.f32 %v1382, %v1565
    %v1570 = vsel %vm122, %v1568, 0.0
    %1571 = vadd.xlane.f32.xlu0 %v1570
    %v1572 = vpop.xlane.xlu0 %1571
    %v1573 = vsel %vm122, %v1569, 0.0
    %1574 = vadd.xlane.f32.xlu0 %v1573
    %v1575 = vpop.xlane.xlu0 %1574
    %v1576 = vmul.f32 %v1572, %v1350
    %v1577 = vmul.f32 %v1575, %v1350
    %v1578 = vsub.f32 %v1568, %v1576
    %v1579 = vsub.f32 %v1569, %v1577
    %v1580 = vmul.f32 %v1578, %v1578
    %v1581 = vmul.f32 %v1579, %v1579
    %v1582 = vsel %vm122, %v1580, 0.0
    %1583 = vadd.xlane.f32.xlu0 %v1582
    %v1584 = vpop.xlane.xlu0 %1583
    %v1585 = vsel %vm122, %v1581, 0.0
    %1586 = vadd.xlane.f32.xlu0 %v1585
    %v1587 = vpop.xlane.xlu0 %1586
    %v1588 = vmul.f32 %v1584, %v1350
    %v1589 = vmul.f32 %v1587, %v1350
    %v1590 = vadd.f32 %v1588, 1e-05
    %v1591 = vadd.f32 %v1589, 1e-05
    %v1592 = vrsqrt.pop %v1590
    %v1593 = vrsqrt.pop %v1591
    %v1594 = vmul.f32 %v1578, %v1592
    %v1595 = vmul.f32 %v1579, %v1593
    %v1596 = vlaneseq
    %v1597 = vshrl.u32 %v1596, 7
    %v1598 = vsub.s32 6, %v1597
    %v1599 = vrot.slane %v113, %v1598
    %v1600 = vmul.f32 %v1594, %v1599
    %v1601 = vmul.f32 %v1595, %v1599
    %v1602 = vlaneseq
    %v1603 = vshrl.u32 %v1602, 7
    %v1604 = vsub.s32 7, %v1603
    %v1605 = vrot.slane %v113, %v1604
    %v1606 = vadd.f32 %v1600, %v1605
    %v1607 = vadd.f32 %v1601, %v1605
    %1608 = vst.msk [vmem:[#allocation13] sm:$0xff] %vm122, %v1606
    %1609 = vst.msk [vmem:[#allocation13 + $0x8] sm:$0xff] %vm122, %v1607
    // Predicated region
    $region54: #{run.1} parent=1 // pred_check
      _
    $region55: #{run.1} parent=1 // pred_check_branch
      %1611 = sbr.rel (0) target = $region57
    $region56: #{run.1} parent=1 // pred_region
      %s1613 = ssub.s32 256, 256
      %1614 = vsyncadd [#allocation4], %s1613
      %s1615 = sshll.u32 [#allocation13], 4
      %s1616 = int_to_ptr.vmem [resolvable:$true] %s1615
      %1621 = dma.vmem_to_hbm [thread:$0]  %s1616, 256, %s7, [#allocation4], 128, 128, 8
    $region57: #{run.1} parent=1 // pred_fallthru
      _
    // Predicated region
    $region58: #{run.1} parent=1 // pred_check
      _
    $region59: #{run.1} parent=1 // pred_check_branch
      %1623 = sbr.rel (0) target = $region61
    $region60: #{run.1} parent=1 // pred_region
      %1624 = dma.done [#allocation4], 256
    $region61: #{run.1} parent=1 // pred_fallthru
      _
    %1625 = vsyncpa [#allocation3], 1
    %1626 = vsyncpa [#allocation6], 1
    %1627 = vsyncpa [#allocation9], 1
    %1628 = vsyncpa [#allocation12], 1
    %1629 = vsyncpa [#allocation4], 1

</llo_original>
